<compile_context>
chip_gen: v7x
topology: tpu7x:2x2x1
jax: 0.10.0
libtpu: 0.0.40
codegen_flags: <defaults>
</compile_context>

<pallas_src>
import functools
import math

import numpy as np
import jax
import jax.numpy as jnp
from jax.experimental import pallas as pl
from jax.experimental.pallas import tpu as pltpu


# ---------------------------------------------------------------------------
# STFT basis construction (numpy; mirrors init_rfft_kernels / init_window).
# ---------------------------------------------------------------------------
def minimum_power_of_two(n: int) -> int:
    return int(2 ** math.ceil(math.log2(n)))


def init_rfft_forward_kernel(win_len: int, n_fft: int) -> np.ndarray:
    N, M, K = n_fft, win_len, n_fft // 2 + 1
    Vc_nk = np.fft.rfft(np.eye(N))                     # (N, K) complex
    Vr_nk, Vi_nk = np.real(Vc_nk), np.imag(Vc_nk)
    V_dm = np.concatenate((Vr_nk.T[:K, :M], Vi_nk.T[:K, :M]), axis=0)  # (2K, M)
    return V_dm.astype(np.float32)


def hamming_window_periodic(win_len: int) -> np.ndarray:
    # == scipy.signal.get_window('hamming', win_len, fftbins=True)
    n = np.arange(win_len)
    return (0.54 - 0.46 * np.cos(2.0 * np.pi * n / win_len)).astype(np.float32)


def make_windowed_stft_basis(win_len: int, fft_len: int, win_type: str = "hamming") -> np.ndarray:
    # TODO(synk): only the periodic hamming window is built in-script (no scipy);
    # other scipy get_window types would need their formulas added here.
    assert win_type == "hamming"
    V_dm = init_rfft_forward_kernel(win_len, fft_len)
    W_m = hamming_window_periodic(win_len)
    return V_dm * W_m[None, :]                         # (2K, win_len) == (V_d1m * W_11m)[:, 0, :]


def _round_up(x: int, m: int) -> int:
    return ((x + m - 1) // m) * m


# ---------------------------------------------------------------------------
# Pallas kernel
# ---------------------------------------------------------------------------
def _conv_stft_kernel(v_ref, x_ref, o_ref, *, n_blocks, t_tile, win_cols):
    # v_ref: (n_blocks, D_pad, hop)  resident windowed DFT basis, hop-block split
    # x_ref: (hop, NR_pad)           per-batch column-major framed signal (resident)
    # o_ref: (D_pad, t_tile)         output tile for grid point (b, t)
    t = pl.program_id(1)
    col0 = pl.multiple_of(t * t_tile, 128)             # lane-aligned window start
    xw = x_ref[:, pl.ds(col0, win_cols)]               # (hop, t_tile + shift_pad)
    for j in range(n_blocks):                          # small static unrolled loop
        vj = v_ref[j]                                  # (D_pad, hop), no lane relayout
        xj = xw[:, j:j + t_tile]                       # (hop, t_tile), static lane shift
        pj = jnp.dot(vj, xj, preferred_element_type=jnp.float32)
        if j == 0:
            o_ref[...] = pj
        else:
            o_ref[...] += pj


# ---------------------------------------------------------------------------
# Wrapper
# ---------------------------------------------------------------------------
def conv_stft(x_bt, V_dm, *, win_len, hop_len, fft_len, t_tile=512,
              compute_dtype=jnp.float32, interpret=False):
    """ConvSTFT forward.  Returns (B, 2, K, T_out) float32 (matches PyTorch layout)."""
    B, T = x_bt.shape
    K = fft_len // 2 + 1
    D = 2 * K
    assert V_dm.shape == (D, win_len), V_dm.shape
    pad_len = win_len - hop_len
    assert pad_len >= 0
    T_out = (T + 2 * pad_len - win_len) // hop_len + 1
    assert T_out >= 1, "input too short for one STFT frame"

    n_blocks = -(-win_len // hop_len)                  # ceil(win/hop)
    shift_pad = 128                                    # extra lane cols covering all shifts
    assert n_blocks - 1 <= shift_pad, "win_len/hop_len ratio too large for this kernel"

    # MXU / lane friendly padded sizes.
    D_pad = _round_up(D, 8)
    t_tile = min(_round_up(t_tile, 128), _round_up(T_out, 128))
    nT = -(-T_out // t_tile)
    T_out_pad = nT * t_tile
    NR_pad = T_out_pad + shift_pad                     # framed-signal columns (lane dim)
    win_cols = t_tile + shift_pad
    total = NR_pad * hop_len                           # padded signal length in samples
    assert total >= T + 2 * pad_len

    # Hop-block split of the windowed basis: Vp3[j, d, r] = V[d, j*hop + r] (0 past win_len).
    Vp = jnp.zeros((D_pad, n_blocks * hop_len), jnp.float32)
    Vp = Vp.at[:D, :win_len].set(jnp.asarray(V_dm, jnp.float32))
    Vp3 = Vp.reshape(D_pad, n_blocks, hop_len).transpose(1, 0, 2)      # (n_blocks, D_pad, hop)

    # Column-major framed signal: Xc[b, r, c] = x_pad[b, c*hop + r] (~1x HBM traffic of x).
    xp = jnp.pad(x_bt.astype(jnp.float32), ((0, 0), (pad_len, total - T - pad_len)))
    Xc = xp.reshape(B, NR_pad, hop_len).transpose(0, 2, 1)             # (B, hop, NR_pad)

    Vp3 = Vp3.astype(compute_dtype)                    # optional bf16 operands, f32 accumulate
    Xc = Xc.astype(compute_dtype)
    itemsize = Xc.dtype.itemsize

    kernel = functools.partial(_conv_stft_kernel, n_blocks=n_blocks,
                               t_tile=t_tile, win_cols=win_cols)

    cost = pl.CostEstimate(
        flops=2 * B * D_pad * n_blocks * hop_len * T_out_pad,
        transcendentals=0,
        bytes_accessed=Vp3.size * itemsize + Xc.size * itemsize + B * D_pad * T_out_pad * 4)

    vmem_est = (2 * hop_len * NR_pad * itemsize        # resident per-batch signal (x2 buffers)
                + 2 * n_blocks * D_pad * hop_len * itemsize   # resident basis
                + 4 * D_pad * t_tile * 4               # output blocks + matmul partials
                + 2 * hop_len * win_cols * 4)          # window slice temporaries
    vmem_limit = int(min(max(2 * vmem_est, 32 * 1024 * 1024), 56 * 1024 * 1024))

    out = pl.pallas_call(
        kernel,
        out_shape=jax.ShapeDtypeStruct((B, D_pad, T_out_pad), jnp.float32),
        grid_spec=pltpu.PrefetchScalarGridSpec(
            num_scalar_prefetch=0,
            grid=(B, nT),
            in_specs=[
                pl.BlockSpec((n_blocks, D_pad, hop_len), lambda b, t: (0, 0, 0)),  # V resident
                pl.BlockSpec((None, hop_len, NR_pad), lambda b, t: (b, 0, 0)),     # x resident/b
            ],
            out_specs=pl.BlockSpec((None, D_pad, t_tile), lambda b, t: (b, 0, t)),
        ),
        compiler_params=pltpu.CompilerParams(
            dimension_semantics=("parallel", "parallel"),
            vmem_limit_bytes=vmem_limit),
        cost_estimate=cost,
        interpret=interpret,
    )(Vp3, Xc)

    X_bdt = out[:, :D, :T_out]                         # crop MXU/lane padding
    return X_bdt.reshape(B, 2, K, T_out)


# ---------------------------------------------------------------------------
# Pure numpy reference (PyTorch conv1d semantics) for the self-check.
# ---------------------------------------------------------------------------
def conv_stft_reference(x_np, V_win_np, win_len, hop_len):
    B, T = x_np.shape
    pad = win_len - hop_len
    xp = np.pad(x_np, ((0, 0), (pad, pad)))
    T_out = (xp.shape[1] - win_len) // hop_len + 1
    idx = np.arange(T_out)[:, None] * hop_len + np.arange(win_len)[None, :]
    frames = xp[:, idx]                                # (B, T_out, win)
    X_bdt = np.einsum("btm,dm->bdt", frames, V_win_np)
    K = V_win_np.shape[0] // 2
    return X_bdt.reshape(B, 2, K, T_out)


if __name__ == "__main__":
    # Small but representative speech-STFT shapes.
    B, T = 2, 24000
    win_len, hop_len = 400, 160
    fft_len = minimum_power_of_two(win_len)            # 512
    K = fft_len // 2 + 1

    V_win = make_windowed_stft_basis(win_len, fft_len, "hamming")    # (2K, win_len)

    key = jax.random.PRNGKey(0)
    x = jax.random.normal(key, (B, T), dtype=jnp.float32)

    out = conv_stft(x, jnp.asarray(V_win), win_len=win_len, hop_len=hop_len,
                    fft_len=fft_len, t_tile=128)       # small tile -> exercises T_out tiling
    out = jax.block_until_ready(out)

    ref = conv_stft_reference(np.asarray(x), V_win, win_len, hop_len)
    assert out.shape == ref.shape, (out.shape, ref.shape)
    err = float(np.max(np.abs(np.asarray(out) - ref)) / (np.max(np.abs(ref)) + 1e-6))
    assert err < 1e-2, f"numerical mismatch vs reference: {err}"
    print("KERNEL_OK")
</pallas_src>

<mosaic_0001>
module attributes {stable_mosaic.version = 11 : i64} {
  func.func @_conv_stft_kernel(%arg0: i32, %arg1: i32, %arg2: memref<3x520x160xf32, #tpu.memory_space<vmem>>, %arg3: memref<1x160x384xf32, #tpu.memory_space<vmem>>, %arg4: memref<1x520x128xf32, #tpu.memory_space<vmem>>) attributes {dimension_semantics = [#tpu.dimension_semantics<parallel>, #tpu.dimension_semantics<parallel>], iteration_bounds = array<i64: 2, 2>, scalar_prefetch = 0 : i64, scratch_operands = 0 : i64, tpu.core_type = #tpu.core_type<tc>, window_params = [{pipeline_mode = #tpu.pipeline_mode<synchronous>, transform_indices = @transform_0, window_bounds = array<i64: 3, 520, 160>}, {transform_indices = @transform_1, window_bounds = array<i64: 1, 160, 384>}, {transform_indices = @transform_2, window_bounds = array<i64: 1, 520, 128>}]} {
    %c128_i32 = arith.constant 128 : i32
    %0 = arith.muli %arg1, %c128_i32 : i32
    %1 = tpu.assume_multiple %0, 128 : i32
    %c0 = arith.constant 0 : index
    %c0_0 = arith.constant 0 : index
    %2 = arith.index_cast %1 : i32 to index
    %3 = vector.load %arg3[%c0, %c0_0, %2] : memref<1x160x384xf32, #tpu.memory_space<vmem>>, vector<1x160x256xf32>
    %4 = vector.shape_cast %3 : vector<1x160x256xf32> to vector<160x256xf32>
    %c0_1 = arith.constant 0 : index
    %c0_2 = arith.constant 0 : index
    %c0_3 = arith.constant 0 : index
    %5 = vector.load %arg2[%c0_1, %c0_2, %c0_3] : memref<3x520x160xf32, #tpu.memory_space<vmem>>, vector<1x520x160xf32>
    %6 = vector.shape_cast %5 : vector<1x520x160xf32> to vector<520x160xf32>
    %7 = vector.extract_strided_slice %4 {offsets = [0, 0], sizes = [160, 128], strides = [1, 1]} : vector<160x256xf32> to vector<160x128xf32>
    %cst = arith.constant dense<0.000000e+00> : vector<520x128xf32>
    %8 = tpu.matmul %6, %7, %cst {dimension_numbers = #tpu.dot_dimension_numbers<[1], [0], [0], [1], [0, 0, 1, 1], [], []>} : vector<520x160xf32>, vector<160x128xf32>, vector<520x128xf32> -> vector<520x128xf32>
    %c0_4 = arith.constant 0 : index
    %c0_5 = arith.constant 0 : index
    %c0_6 = arith.constant 0 : index
    %9 = vector.load %arg4[%c0_4, %c0_5, %c0_6] : memref<1x520x128xf32, #tpu.memory_space<vmem>>, vector<1x520x128xf32>
    %10 = vector.shape_cast %9 : vector<1x520x128xf32> to vector<520x128xf32>
    %11 = vector.shape_cast %8 : vector<520x128xf32> to vector<1x520x128xf32>
    tpu.vector_store %arg4[%c0_4, %c0_5, %c0_6], %11 {strides = array<i32>} : memref<1x520x128xf32, #tpu.memory_space<vmem>>, vector<1x520x128xf32>,
    %c1 = arith.constant 1 : index
    %c0_7 = arith.constant 0 : index
    %c0_8 = arith.constant 0 : index
    %12 = vector.load %arg2[%c1, %c0_7, %c0_8] : memref<3x520x160xf32, #tpu.memory_space<vmem>>, vector<1x520x160xf32>
    %13 = vector.shape_cast %12 : vector<1x520x160xf32> to vector<520x160xf32>
    %14 = vector.extract_strided_slice %4 {offsets = [0, 1], sizes = [160, 128], strides = [1, 1]} : vector<160x256xf32> to vector<160x128xf32>
    %cst_9 = arith.constant dense<0.000000e+00> : vector<520x128xf32>
    %15 = tpu.matmul %13, %14, %cst_9 {dimension_numbers = #tpu.dot_dimension_numbers<[1], [0], [0], [1], [0, 0, 1, 1], [], []>} : vector<520x160xf32>, vector<160x128xf32>, vector<520x128xf32> -> vector<520x128xf32>
    %c0_10 = arith.constant 0 : index
    %c0_11 = arith.constant 0 : index
    %c0_12 = arith.constant 0 : index
    %16 = vector.load %arg4[%c0_10, %c0_11, %c0_12] : memref<1x520x128xf32, #tpu.memory_space<vmem>>, vector<1x520x128xf32>
    %17 = vector.shape_cast %16 : vector<1x520x128xf32> to vector<520x128xf32>
    %18 = arith.addf %17, %15 : vector<520x128xf32>
    %c0_13 = arith.constant 0 : index
    %c0_14 = arith.constant 0 : index
    %c0_15 = arith.constant 0 : index
    %19 = vector.load %arg4[%c0_13, %c0_14, %c0_15] : memref<1x520x128xf32, #tpu.memory_space<vmem>>, vector<1x520x128xf32>
    %20 = vector.shape_cast %19 : vector<1x520x128xf32> to vector<520x128xf32>
    %21 = vector.shape_cast %18 : vector<520x128xf32> to vector<1x520x128xf32>
    tpu.vector_store %arg4[%c0_13, %c0_14, %c0_15], %21 {strides = array<i32>} : memref<1x520x128xf32, #tpu.memory_space<vmem>>, vector<1x520x128xf32>,
    %c2 = arith.constant 2 : index
    %c0_16 = arith.constant 0 : index
    %c0_17 = arith.constant 0 : index
    %22 = vector.load %arg2[%c2, %c0_16, %c0_17] : memref<3x520x160xf32, #tpu.memory_space<vmem>>, vector<1x520x160xf32>
    %23 = vector.shape_cast %22 : vector<1x520x160xf32> to vector<520x160xf32>
    %24 = vector.extract_strided_slice %4 {offsets = [0, 2], sizes = [160, 128], strides = [1, 1]} : vector<160x256xf32> to vector<160x128xf32>
    %cst_18 = arith.constant dense<0.000000e+00> : vector<520x128xf32>
    %25 = tpu.matmul %23, %24, %cst_18 {dimension_numbers = #tpu.dot_dimension_numbers<[1], [0], [0], [1], [0, 0, 1, 1], [], []>} : vector<520x160xf32>, vector<160x128xf32>, vector<520x128xf32> -> vector<520x128xf32>
    %c0_19 = arith.constant 0 : index
    %c0_20 = arith.constant 0 : index
    %c0_21 = arith.constant 0 : index
    %26 = vector.load %arg4[%c0_19, %c0_20, %c0_21] : memref<1x520x128xf32, #tpu.memory_space<vmem>>, vector<1x520x128xf32>
    %27 = vector.shape_cast %26 : vector<1x520x128xf32> to vector<520x128xf32>
    %28 = arith.addf %27, %25 : vector<520x128xf32>
    %c0_22 = arith.constant 0 : index
    %c0_23 = arith.constant 0 : index
    %c0_24 = arith.constant 0 : index
    %29 = vector.load %arg4[%c0_22, %c0_23, %c0_24] : memref<1x520x128xf32, #tpu.memory_space<vmem>>, vector<1x520x128xf32>
    %30 = vector.shape_cast %29 : vector<1x520x128xf32> to vector<520x128xf32>
    %31 = vector.shape_cast %28 : vector<520x128xf32> to vector<1x520x128xf32>
    tpu.vector_store %arg4[%c0_22, %c0_23, %c0_24], %31 {strides = array<i32>} : memref<1x520x128xf32, #tpu.memory_space<vmem>>, vector<1x520x128xf32>,
    return
  }
  func.func @transform_0(%arg0: i32, %arg1: i32) -> (i32, i32, i32) {
    %c0_i32 = arith.constant 0 : i32
    %c0_i32_0 = arith.constant 0 : i32
    %c0_i32_1 = arith.constant 0 : i32
    %c0_i32_2 = arith.constant 0 : i32
    return %c0_i32, %c0_i32_0, %c0_i32_1 : i32, i32, i32
  }
  func.func @transform_1(%arg0: i32, %arg1: i32) -> (i32, i32, i32) {
    %c0_i32 = arith.constant 0 : i32
    %c0_i32_0 = arith.constant 0 : i32
    %c0_i32_1 = arith.constant 0 : i32
    return %arg0, %c0_i32, %c0_i32_0 : i32, i32, i32
  }
  func.func @transform_2(%arg0: i32, %arg1: i32) -> (i32, i32, i32) {
    %c0_i32 = arith.constant 0 : i32
    %c0_i32_0 = arith.constant 0 : i32
    return %arg0, %c0_i32, %arg1 : i32, i32, i32
  }
}

</mosaic_0001>

<llo_original>
// kernel: tpu_custom_call.1
$region0: #{tpu_custom_call.1}
  #allocation0 [shape = 'u32[]', space=smem, size = 0x4, offset = 0x4, fixed_abs, tag = 'smem constant byte address 0x4 - core index']
  #allocation1 [shape = 'u32[144,128]{1,0:T(1,128)}', space=vmem, size = 0x12000, scoped, tag = 'internal scratch']
  %s0 = inlined_call_operand.vmem [shape: f32[3,520,160], index: 0, kind: input, shape index: {}]
  %s1 = inlined_call_operand.vmem [shape: f32[2,160,384], index: 1, kind: input, shape index: {}]
  %s2 = inlined_call_operand.hbm [shape: f32[2,520,256], index: 2, kind: output, shape index: {}]
  %s3 = sld [smem:[#allocation0]]
  $region41: #{tpu_custom_call.1} parent=0
    _
  %s5 = ssub.s32 1, %s3
  %s6 = scalar_select 0, %s5, %s3
  $region1: #{tpu_custom_call.1} parent=0
    #allocation2 [shape = 'u8[532480]{0}', space=vmem, size = 0x82000, scoped, tag = 'output window, operand 0']
    #allocation3 [shape = 's32[2]{0}', space=sflag, size = 0x8, scoped, tag = 'scoped memory for tpu_custom_call.1']
    %7 = vsyncpa [#allocation3], 0
    %s8 = scalar_lea.sflag [#allocation3], 1
    %9 = vsyncpa %s8, 0
    loop: start=0, step=1, limit=6
    $region2: #{tpu_custom_call.1} parent=1 // loop_pre_header
      _
    $region3: #{tpu_custom_call.1} parent=1 // loop_header
      %s11 = sphi 0, %s15
      %p12 = scmp.ge.s32.totalorder %s11, 6
      %s18 = sphi 0, %s30
      %s19 = sphi 0, %s26
      %s20 = sphi 0, %s18
      %s21 = sphi 0, %s19
      %s22 = sphi 0, %s20
      %s23 = sphi 0, %s21
      %s31 = sphi 0, %s31
      %s33 = sphi 0, %s31
      %s34 = sphi 0, %s33
      %s48 = sphi 0, %s34
      %s54 = sphi 0, %s56
      %s57 = sphi 0, %s54
      %s58 = sphi 0, %s57
      %s74 = sphi 0, %s58
      %s82 = sphi 0, %s84
      %s85 = sphi 0, %s82
      %s86 = sphi 0, %s85
      %s102 = sphi 0, %s86
    $region4: #{tpu_custom_call.1} parent=1 // loop_header_branch
      %14 = sbr.rel (%p12) target = $region8
    $region5: #{tpu_custom_call.1} parent=1 // loop_body
      %s16 = ssub.s32 %s11, 1
      %s17 = ssub.s32 %s11, 2
      %s24 = sadd.s32 1, %s19
      %p25 = scmp.ge.s32.totalorder %s24, 2
      %s26 = scalar_select %p25, 0, %s24
      %s27 = sadd.s32 1, %s18
      %s28 = scalar_select %p25, %s27, %s18
      %p29 = scmp.ge.s32.totalorder %s28, 2
      %s30 = scalar_select %p29, 0, %s28
      %s32 = sadd.s32 %s31, 1
      %p35 = scmp.eq.s32.totalorder %s11, 3
      %p36 = scmp.ne.s32.totalorder %s31, %s33
      %p37 = scmp.eq.s32.totalorder %s11, 0
      %p38 = por %p36, %p37
      %p39 = scmp.ne.s32.totalorder %s31, %s33
      %p40 = scmp.eq.s32.totalorder %s16, 3
      %p41 = por %p39, %p40
      %p42 = scmp.ne.s32.totalorder %s33, %s34
      %p43 = scmp.eq.s32.totalorder %s16, 0
      %p44 = por %p42, %p43
      %p45 = scmp.ne.s32.totalorder %s33, %s34
      %p46 = scmp.eq.s32.totalorder %s17, 3
      %p47 = por %p45, %p46
      %p49 = scmp.ne.s32.totalorder %s34, %s48
      %p50 = scmp.eq.s32.totalorder %s17, 0
      %p51 = por %p49, %p50
      %s52 = ssub.s32 %s18, %s30
      %p53 = scmp.eq.s32.totalorder %s52, 0
      %s55 = sadd.s32 %s54, 1
      %s56 = scalar_select %p53, %s54, %s55
      %p59 = pneg %p53
      %p60 = scmp.eq.s32.totalorder %s11, 3
      %p61 = por %p59, %p60
      %p62 = scmp.ne.s32.totalorder %s54, %s57
      %p63 = scmp.eq.s32.totalorder %s11, 0
      %p64 = por %p62, %p63
      %p65 = scmp.ne.s32.totalorder %s54, %s57
      %p66 = scmp.eq.s32.totalorder %s16, 3
      %p67 = por %p65, %p66
      %p68 = scmp.ne.s32.totalorder %s57, %s58
      %p69 = scmp.eq.s32.totalorder %s16, 0
      %p70 = por %p68, %p69
      %p71 = scmp.ne.s32.totalorder %s57, %s58
      %p72 = scmp.eq.s32.totalorder %s17, 3
      %p73 = por %p71, %p72
      %p75 = scmp.ne.s32.totalorder %s58, %s74
      %p76 = scmp.eq.s32.totalorder %s17, 0
      %p77 = por %p75, %p76
      %s78 = ssub.s32 %s18, %s30
      %s79 = ssub.s32 %s19, %s26
      %s80 = sor.u32 %s78, %s79
      %p81 = scmp.eq.s32.totalorder %s80, 0
      %s83 = sadd.s32 %s82, 1
      %s84 = scalar_select %p81, %s82, %s83
      %p87 = pneg %p81
      %p88 = scmp.eq.s32.totalorder %s11, 3
      %p89 = por %p87, %p88
      %p90 = scmp.ne.s32.totalorder %s82, %s85
      %p91 = scmp.eq.s32.totalorder %s11, 0
      %p92 = por %p90, %p91
      %p93 = scmp.ne.s32.totalorder %s82, %s85
      %p94 = scmp.eq.s32.totalorder %s16, 3
      %p95 = por %p93, %p94
      %p96 = scmp.ne.s32.totalorder %s85, %s86
      %p97 = scmp.eq.s32.totalorder %s16, 0
      %p98 = por %p96, %p97
      %p99 = scmp.ne.s32.totalorder %s85, %s86
      %p100 = scmp.eq.s32.totalorder %s17, 3
      %p101 = por %p99, %p100
      %p103 = scmp.ne.s32.totalorder %s86, %s102
      %p104 = scmp.eq.s32.totalorder %s17, 0
      %p105 = por %p103, %p104
      %p106 = scmp.le.s32.totalorder 1, %s11
      %p107 = scmp.lt.s32.totalorder %s11, 5
      %p108 = pnand %p106, %p107
      %p109 = pneg %p108
      // Predicated region
      $region9: #{tpu_custom_call.1} parent=5 // pred_check
        _
      $region10: #{tpu_custom_call.1} parent=5 // pred_check_branch
        %111 = sbr.rel (%p108) target = $region12
      $region11: #{tpu_custom_call.1} parent=5 // pred_region
        %s112 = ssub.s32 %s11, 1
        // Predicated region
        $region13: #{tpu_custom_call.1} parent=11 // pred_check
          %p113 = pneg %p44
        $region14: #{tpu_custom_call.1} parent=11 // pred_check_branch
          %115 = sbr.rel (%p113) target = $region16
        $region15: #{tpu_custom_call.1} parent=11 // pred_region
          _
        $region16: #{tpu_custom_call.1} parent=11 // pred_fallthru
          _
      $region12: #{tpu_custom_call.1} parent=5 // pred_fallthru
        _
      %p116 = scmp.lt.s32.totalorder %s11, 4
      // Predicated region
      $region17: #{tpu_custom_call.1} parent=5 // pred_check
        %p117 = pneg %p116
      $region18: #{tpu_custom_call.1} parent=5 // pred_check_branch
        %119 = sbr.rel (%p117) target = $region20
      $region19: #{tpu_custom_call.1} parent=5 // pred_region
        // Predicated region
        $region21: #{tpu_custom_call.1} parent=19 // pred_check
          %p120 = pneg %p64
        $region22: #{tpu_custom_call.1} parent=19 // pred_check_branch
          %122 = sbr.rel (%p120) target = $region24
        $region23: #{tpu_custom_call.1} parent=19 // pred_region
          %p123 = scmp.lt.s32.totalorder %s18, 1
          %s124 = scalar_select %p123, %s18, 1
          %s125 = smul.addr %s124, 60
          %s126 = smul.addr %s125, 8
          %s127 = scalar_lea.vmem %s1, %s126
        $region24: #{tpu_custom_call.1} parent=19 // pred_fallthru
          _
      $region20: #{tpu_custom_call.1} parent=5 // pred_fallthru
        _
      %p128 = scmp.le.s32.totalorder 1, %s11
      %p129 = scmp.lt.s32.totalorder %s11, 5
      %p130 = pnand %p128, %p129
      %p131 = pneg %p130
      // Predicated region
      $region25: #{tpu_custom_call.1} parent=5 // pred_check
        _
      $region26: #{tpu_custom_call.1} parent=5 // pred_check_branch
        %133 = sbr.rel (%p130) target = $region28
      $region27: #{tpu_custom_call.1} parent=5 // pred_region
        %s134 = ssub.s32 %s11, 1
        %p135 = pneg %p44
        %p136 = pneg %p41
        %p137 = scmp.lt.s32.totalorder %s20, 1
        %s138 = scalar_select %p137, %s20, 1
        %s139 = smul.addr %s138, 60
        %s140 = smul.addr %s139, 8
        %s141 = scalar_lea.vmem %s1, %s140
        %p142 = pneg %p70
        %p143 = pneg %p67
        %p144 = pneg %p98
        %p145 = pneg %p95
        %s146 = sand.u32 %s85, 1
        %s147 = scalar_lea.sflag [#allocation3], %s146
        %s148 = sand.u32 %s85, 1
        %s149 = smul.addr %s148, 520
        %s150 = scalar_lea.vmem [#allocation2], %s149
        %p151 = scmp.lt.s32.totalorder %s20, 1
        %s152 = scalar_select %p151, %s20, 1
        %s153 = smul.addr %s152, 60
        %s154 = smul.addr %s153, 8
        %s155 = scalar_lea.vmem %s1, %s154
        %s156 = smul.u32 %s21, 128
        %s157 = sshra.s32 %s156, 7
        %s158 = sand.u32 %s156, 127
        %s159 = smul.addr %s157, 8
        %s160 = scalar_lea.vmem %s155, %s159
        %v161 = vld [vmem:[%s160] sm:$0xff]
        %v162 = vld [vmem:[%s160 + $0x8] sm:$0xff]
        %v163 = vld [vmem:[%s160 + $0x18] sm:$0xff]
        %v164 = vld [vmem:[%s160 + $0x20] sm:$0xff]
        %v165 = vld [vmem:[%s160 + $0x30] sm:$0xff]
        %v166 = vld [vmem:[%s160 + $0x38] sm:$0xff]
        %v167 = vld [vmem:[%s160 + $0x48] sm:$0xff]
        %v168 = vld [vmem:[%s160 + $0x50] sm:$0xff]
        %v169 = vld [vmem:[%s160 + $0x60] sm:$0xff]
        %v170 = vld [vmem:[%s160 + $0x68] sm:$0xff]
        %v171 = vld [vmem:[%s160 + $0x78] sm:$0xff]
        %v172 = vld [vmem:[%s160 + $0x80] sm:$0xff]
        %v173 = vld [vmem:[%s160 + $0x90] sm:$0xff]
        %v174 = vld [vmem:[%s160 + $0x98] sm:$0xff]
        %v175 = vld [vmem:[%s160 + $0xa8] sm:$0xff]
        %v176 = vld [vmem:[%s160 + $0xb0] sm:$0xff]
        %v177 = vld [vmem:[%s160 + $0xc0] sm:$0xff]
        %v178 = vld [vmem:[%s160 + $0xc8] sm:$0xff]
        %v179 = vld [vmem:[%s160 + $0xd8] sm:$0xff]
        %v180 = vld [vmem:[%s160 + $0xe0] sm:$0xff]
        %v181 = vld [vmem:[%s160 + $0xf0] sm:$0xff]
        %v182 = vld [vmem:[%s160 + $0xf8] sm:$0xff]
        %v183 = vld [vmem:[%s160 + $0x108] sm:$0xff]
        %v184 = vld [vmem:[%s160 + $0x110] sm:$0xff]
        %v185 = vld [vmem:[%s160 + $0x120] sm:$0xff]
        %v186 = vld [vmem:[%s160 + $0x128] sm:$0xff]
        %v187 = vld [vmem:[%s160 + $0x138] sm:$0xff]
        %v188 = vld [vmem:[%s160 + $0x140] sm:$0xff]
        %v189 = vld [vmem:[%s160 + $0x150] sm:$0xff]
        %v190 = vld [vmem:[%s160 + $0x158] sm:$0xff]
        %v191 = vld [vmem:[%s160 + $0x168] sm:$0xff]
        %v192 = vld [vmem:[%s160 + $0x170] sm:$0xff]
        %v193 = vld [vmem:[%s160 + $0x180] sm:$0xff]
        %v194 = vld [vmem:[%s160 + $0x188] sm:$0xff]
        %v195 = vld [vmem:[%s160 + $0x198] sm:$0xff]
        %v196 = vld [vmem:[%s160 + $0x1a0] sm:$0xff]
        %v197 = vld [vmem:[%s160 + $0x1b0] sm:$0xff]
        %v198 = vld [vmem:[%s160 + $0x1b8] sm:$0xff]
        %v199 = vld [vmem:[%s160 + $0x1c8] sm:$0xff]
        %v200 = vld [vmem:[%s160 + $0x1d0] sm:$0xff]
        %v201 = vld [vmem:[%s0] sm:$0xff]
        %v202 = vld [vmem:[%s0 + $0x8] sm:$0xff]
        %v203 = vld [vmem:[%s0 + $0x10] sm:$0xff]
        %v204 = vld [vmem:[%s0 + $0x18] sm:$0xff]
        %v205 = vld [vmem:[%s0 + $0x20] sm:$0xff]
        %v206 = vld [vmem:[%s0 + $0x28] sm:$0xff]
        %v207 = vld [vmem:[%s0 + $0x30] sm:$0xff]
        %v208 = vld [vmem:[%s0 + $0x38] sm:$0xff]
        %v209 = vld [vmem:[%s0 + $0x40] sm:$0xff]
        %v210 = vld [vmem:[%s0 + $0x48] sm:$0xff]
        %v211 = vld [vmem:[%s0 + $0x50] sm:$0xff]
        %v212 = vld [vmem:[%s0 + $0x58] sm:$0xff]
        %v213 = vld [vmem:[%s0 + $0x60] sm:$0xff]
        %v214 = vld [vmem:[%s0 + $0x68] sm:$0xff]
        %v215 = vld [vmem:[%s0 + $0x70] sm:$0xff]
        %v216 = vld [vmem:[%s0 + $0x78] sm:$0xff]
        %v217 = vld [vmem:[%s0 + $0x80] sm:$0xff]
        %v218 = vld [vmem:[%s0 + $0x88] sm:$0xff]
        %v219 = vld [vmem:[%s0 + $0x90] sm:$0xff]
        %v220 = vld [vmem:[%s0 + $0x98] sm:$0xff]
        %v221 = vld [vmem:[%s0 + $0xa0] sm:$0xff]
        %v222 = vld [vmem:[%s0 + $0xa8] sm:$0xff]
        %v223 = vld [vmem:[%s0 + $0xb0] sm:$0xff]
        %v224 = vld [vmem:[%s0 + $0xb8] sm:$0xff]
        %v225 = vld [vmem:[%s0 + $0xc0] sm:$0xff]
        %v226 = vld [vmem:[%s0 + $0xc8] sm:$0xff]
        %v227 = vld [vmem:[%s0 + $0xd0] sm:$0xff]
        %v228 = vld [vmem:[%s0 + $0xd8] sm:$0xff]
        %v229 = vld [vmem:[%s0 + $0xe0] sm:$0xff]
        %v230 = vld [vmem:[%s0 + $0xe8] sm:$0xff]
        %v231 = vld [vmem:[%s0 + $0xf0] sm:$0xff]
        %v232 = vld [vmem:[%s0 + $0xf8] sm:$0xff]
        %v233 = vld [vmem:[%s0 + $0x100] sm:$0xff]
        %v234 = vld [vmem:[%s0 + $0x108] sm:$0xff]
        %v235 = vld [vmem:[%s0 + $0x110] sm:$0xff]
        %v236 = vld [vmem:[%s0 + $0x118] sm:$0xff]
        %v237 = vld [vmem:[%s0 + $0x120] sm:$0xff]
        %v238 = vld [vmem:[%s0 + $0x128] sm:$0xff]
        %v239 = vld [vmem:[%s0 + $0x130] sm:$0xff]
        %v240 = vld [vmem:[%s0 + $0x138] sm:$0xff]
        %v241 = vld [vmem:[%s0 + $0x140] sm:$0xff]
        %v242 = vld [vmem:[%s0 + $0x148] sm:$0xff]
        %v243 = vld [vmem:[%s0 + $0x150] sm:$0xff]
        %v244 = vld [vmem:[%s0 + $0x158] sm:$0xff]
        %v245 = vld [vmem:[%s0 + $0x160] sm:$0xff]
        %v246 = vld [vmem:[%s0 + $0x168] sm:$0xff]
        %v247 = vld [vmem:[%s0 + $0x170] sm:$0xff]
        %v248 = vld [vmem:[%s0 + $0x178] sm:$0xff]
        %v249 = vld [vmem:[%s0 + $0x180] sm:$0xff]
        %v250 = vld [vmem:[%s0 + $0x188] sm:$0xff]
        %v251 = vld [vmem:[%s0 + $0x190] sm:$0xff]
        %v252 = vld [vmem:[%s0 + $0x198] sm:$0xff]
        %v253 = vld [vmem:[%s0 + $0x1a0] sm:$0xff]
        %v254 = vld [vmem:[%s0 + $0x1a8] sm:$0xff]
        %v255 = vld [vmem:[%s0 + $0x1b0] sm:$0xff]
        %v256 = vld [vmem:[%s0 + $0x1b8] sm:$0xff]
        %v257 = vld [vmem:[%s0 + $0x1c0] sm:$0xff]
        %v258 = vld [vmem:[%s0 + $0x1c8] sm:$0xff]
        %v259 = vld [vmem:[%s0 + $0x1d0] sm:$0xff]
        %v260 = vld [vmem:[%s0 + $0x1d8] sm:$0xff]
        %v261 = vld [vmem:[%s0 + $0x1e0] sm:$0xff]
        %v262 = vld [vmem:[%s0 + $0x1e8] sm:$0xff]
        %v263 = vld [vmem:[%s0 + $0x1f0] sm:$0xff]
        %v264 = vld [vmem:[%s0 + $0x1f8] sm:$0xff]
        %v265 = vld [vmem:[%s0 + $0x200] sm:$0xff]
        %v266 = vld [vmem:[%s0 + $0x208] sm:$0xff]
        %v267 = vld [vmem:[%s0 + $0x210] sm:$0xff]
        %v268 = vld [vmem:[%s0 + $0x218] sm:$0xff]
        %v269 = vld [vmem:[%s0 + $0x220] sm:$0xff]
        %v270 = vld [vmem:[%s0 + $0x228] sm:$0xff]
        %v271 = vld [vmem:[%s0 + $0x230] sm:$0xff]
        %v272 = vld [vmem:[%s0 + $0x238] sm:$0xff]
        %v273 = vld [vmem:[%s0 + $0x240] sm:$0xff]
        %v274 = vld [vmem:[%s0 + $0x248] sm:$0xff]
        %v275 = vld [vmem:[%s0 + $0x250] sm:$0xff]
        %v276 = vld [vmem:[%s0 + $0x258] sm:$0xff]
        %v277 = vld [vmem:[%s0 + $0x260] sm:$0xff]
        %v278 = vld [vmem:[%s0 + $0x268] sm:$0xff]
        %v279 = vld [vmem:[%s0 + $0x270] sm:$0xff]
        %v280 = vld [vmem:[%s0 + $0x278] sm:$0xff]
        %v281 = vld [vmem:[%s0 + $0x280] sm:$0xff]
        %v282 = vld [vmem:[%s0 + $0x288] sm:$0xff]
        %v283 = vld [vmem:[%s0 + $0x290] sm:$0xff]
        %v284 = vld [vmem:[%s0 + $0x298] sm:$0xff]
        %v285 = vld [vmem:[%s0 + $0x2a0] sm:$0xff]
        %v286 = vld [vmem:[%s0 + $0x2a8] sm:$0xff]
        %v287 = vld [vmem:[%s0 + $0x2b0] sm:$0xff]
        %v288 = vld [vmem:[%s0 + $0x2b8] sm:$0xff]
        %v289 = vld [vmem:[%s0 + $0x2c0] sm:$0xff]
        %v290 = vld [vmem:[%s0 + $0x2c8] sm:$0xff]
        %v291 = vld [vmem:[%s0 + $0x2d0] sm:$0xff]
        %v292 = vld [vmem:[%s0 + $0x2d8] sm:$0xff]
        %v293 = vld [vmem:[%s0 + $0x2e0] sm:$0xff]
        %v294 = vld [vmem:[%s0 + $0x2e8] sm:$0xff]
        %v295 = vld [vmem:[%s0 + $0x2f0] sm:$0xff]
        %v296 = vld [vmem:[%s0 + $0x2f8] sm:$0xff]
        %v297 = vld [vmem:[%s0 + $0x300] sm:$0xff]
        %v298 = vld [vmem:[%s0 + $0x308] sm:$0xff]
        %v299 = vld [vmem:[%s0 + $0x310] sm:$0xff]
        %v300 = vld [vmem:[%s0 + $0x318] sm:$0xff]
        %v301 = vld [vmem:[%s0 + $0x320] sm:$0xff]
        %v302 = vld [vmem:[%s0 + $0x328] sm:$0xff]
        %v303 = vld [vmem:[%s0 + $0x330] sm:$0xff]
        %v304 = vld [vmem:[%s0 + $0x338] sm:$0xff]
        %v305 = vld [vmem:[%s0 + $0x340] sm:$0xff]
        %v306 = vld [vmem:[%s0 + $0x348] sm:$0xff]
        %v307 = vld [vmem:[%s0 + $0x350] sm:$0xff]
        %v308 = vld [vmem:[%s0 + $0x358] sm:$0xff]
        %v309 = vld [vmem:[%s0 + $0x360] sm:$0xff]
        %v310 = vld [vmem:[%s0 + $0x368] sm:$0xff]
        %v311 = vld [vmem:[%s0 + $0x370] sm:$0xff]
        %v312 = vld [vmem:[%s0 + $0x378] sm:$0xff]
        %v313 = vld [vmem:[%s0 + $0x380] sm:$0xff]
        %v314 = vld [vmem:[%s0 + $0x388] sm:$0xff]
        %v315 = vld [vmem:[%s0 + $0x390] sm:$0xff]
        %v316 = vld [vmem:[%s0 + $0x398] sm:$0xff]
        %v317 = vld [vmem:[%s0 + $0x3a0] sm:$0xff]
        %v318 = vld [vmem:[%s0 + $0x3a8] sm:$0xff]
        %v319 = vld [vmem:[%s0 + $0x3b0] sm:$0xff]
        %v320 = vld [vmem:[%s0 + $0x3b8] sm:$0xff]
        %v321 = vld [vmem:[%s0 + $0x3c0] sm:$0xff]
        %v322 = vld [vmem:[%s0 + $0x3c8] sm:$0xff]
        %v323 = vld [vmem:[%s0 + $0x3d0] sm:$0xff]
        %v324 = vld [vmem:[%s0 + $0x3d8] sm:$0xff]
        %v325 = vld [vmem:[%s0 + $0x3e0] sm:$0xff]
        %v326 = vld [vmem:[%s0 + $0x3e8] sm:$0xff]
        %v327 = vld [vmem:[%s0 + $0x3f0] sm:$0xff]
        %v328 = vld [vmem:[%s0 + $0x3f8] sm:$0xff]
        %v329 = vld [vmem:[%s0 + $0x400] sm:$0xff]
        %v330 = vld [vmem:[%s0 + $0x408] sm:$0xff]
        %vm331 = vcmask 261120
        %v333 = vsel %vm331, %v202, 0
        %v336 = vsel %vm331, %v204, 0
        %v339 = vsel %vm331, %v206, 0
        %v342 = vsel %vm331, %v208, 0
        %v345 = vsel %vm331, %v210, 0
        %v348 = vsel %vm331, %v212, 0
        %v351 = vsel %vm331, %v214, 0
        %v354 = vsel %vm331, %v216, 0
        %v357 = vsel %vm331, %v218, 0
        %v360 = vsel %vm331, %v220, 0
        %v363 = vsel %vm331, %v222, 0
        %v366 = vsel %vm331, %v224, 0
        %v369 = vsel %vm331, %v226, 0
        %v372 = vsel %vm331, %v228, 0
        %v375 = vsel %vm331, %v230, 0
        %v378 = vsel %vm331, %v232, 0
        %v381 = vsel %vm331, %v234, 0
        %v384 = vsel %vm331, %v236, 0
        %v387 = vsel %vm331, %v238, 0
        %v390 = vsel %vm331, %v240, 0
        %v393 = vsel %vm331, %v242, 0
        %v396 = vsel %vm331, %v244, 0
        %v399 = vsel %vm331, %v246, 0
        %v402 = vsel %vm331, %v248, 0
        %v405 = vsel %vm331, %v250, 0
        %v408 = vsel %vm331, %v252, 0
        %v411 = vsel %vm331, %v254, 0
        %v414 = vsel %vm331, %v256, 0
        %v417 = vsel %vm331, %v258, 0
        %v420 = vsel %vm331, %v260, 0
        %v423 = vsel %vm331, %v262, 0
        %v426 = vsel %vm331, %v264, 0
        %v429 = vsel %vm331, %v266, 0
        %v432 = vsel %vm331, %v268, 0
        %v435 = vsel %vm331, %v270, 0
        %v438 = vsel %vm331, %v272, 0
        %v441 = vsel %vm331, %v274, 0
        %v444 = vsel %vm331, %v276, 0
        %v447 = vsel %vm331, %v278, 0
        %v450 = vsel %vm331, %v280, 0
        %v453 = vsel %vm331, %v282, 0
        %v456 = vsel %vm331, %v284, 0
        %v459 = vsel %vm331, %v286, 0
        %v462 = vsel %vm331, %v288, 0
        %v465 = vsel %vm331, %v290, 0
        %v468 = vsel %vm331, %v292, 0
        %v471 = vsel %vm331, %v294, 0
        %v474 = vsel %vm331, %v296, 0
        %v477 = vsel %vm331, %v298, 0
        %v480 = vsel %vm331, %v300, 0
        %v483 = vsel %vm331, %v302, 0
        %v486 = vsel %vm331, %v304, 0
        %v489 = vsel %vm331, %v306, 0
        %v492 = vsel %vm331, %v308, 0
        %v495 = vsel %vm331, %v310, 0
        %v498 = vsel %vm331, %v312, 0
        %v501 = vsel %vm331, %v314, 0
        %v504 = vsel %vm331, %v316, 0
        %v507 = vsel %vm331, %v318, 0
        %v510 = vsel %vm331, %v320, 0
        %v513 = vsel %vm331, %v322, 0
        %v516 = vsel %vm331, %v324, 0
        %v519 = vsel %vm331, %v326, 0
        %v522 = vsel %vm331, %v328, 0
        %v525 = vsel %vm331, %v330, 0
        %527 = vmatprep.subr.mxu0 0.0
        %528 = vmatpush1.msra.mxu0 %v161
        %529 = vmatprep.subr.mxu0 0.0
        %530 = vmatpush1.msra.mxu0 %v163
        %531 = vmatprep.subr.mxu0 0.0
        %532 = vmatpush1.msra.mxu0 %v165
        %533 = vmatprep.subr.mxu0 0.0
        %534 = vmatpush1.msra.mxu0 %v167
        %535 = vmatprep.subr.mxu0 0.0
        %536 = vmatpush1.msra.mxu0 %v169
        %537 = vmatprep.subr.mxu0 0.0
        %538 = vmatpush1.msra.mxu0 %v171
        %539 = vmatprep.subr.mxu0 0.0
        %540 = vmatpush1.msra.mxu0 %v173
        %541 = vmatprep.subr.mxu0 0.0
        %542 = vmatpush1.msra.mxu0 %v175
        %543 = vmatprep.subr.mxu0 0.0
        %544 = vmatpush1.msra.mxu0 %v177
        %545 = vmatprep.subr.mxu0 0.0
        %546 = vmatpush1.msra.mxu0 %v179
        %547 = vmatprep.subr.mxu0 0.0
        %548 = vmatpush1.msra.mxu0 %v181
        %549 = vmatprep.subr.mxu0 0.0
        %550 = vmatpush1.msra.mxu0 %v183
        %551 = vmatprep.subr.mxu0 0.0
        %552 = vmatpush1.msra.mxu0 %v185
        %553 = vmatprep.subr.mxu0 0.0
        %554 = vmatpush1.msra.mxu0 %v187
        %555 = vmatprep.subr.mxu0 0.0
        %556 = vmatpush1.msra.mxu0 %v189
        %557 = vmatprep.subr.mxu0 0.0
        %558 = vmatpush1.msra.mxu0 %v191
        %559 = vmatprep.subr.mxu0 0.0
        %560 = vmatpush1.msra.mxu0 %v193
        %561 = vmatprep.subr.mxu0 0.0
        %562 = vmatpush1.msra.mxu0 %v195
        %563 = vmatprep.subr.mxu0 0.0
        %564 = vmatpush1.msra.mxu0 %v197
        %565 = vmatprep.subr.mxu0 0.0
        %566 = vmatpush1.msra.mxu0 %v199
        %567 = vmatprep.subr.mxu0 0.0
        %568 = vmatpush1.msra.mxu0 0.0
        %569 = vmatprep.subr.mxu0 0.0
        %570 = vmatpush1.msra.mxu0 0.0
        %571 = vmatprep.subr.mxu0 0.0
        %572 = vmatpush1.msra.mxu0 0.0
        %573 = vmatprep.subr.mxu0 0.0
        %574 = vmatpush1.msra.mxu0 0.0
        %575 = vmatprep.subr.mxu0 0.0
        %576 = vmatpush1.msra.mxu0 0.0
        %577 = vmatprep.subr.mxu0 0.0
        %578 = vmatpush1.msra.mxu0 0.0
        %579 = vmatprep.subr.mxu0 0.0
        %580 = vmatpush1.msra.mxu0 0.0
        %581 = vmatprep.subr.mxu0 0.0
        %582 = vmatpush1.msra.mxu0 0.0
        %583 = vmatprep.subr.mxu0 0.0
        %584 = vmatpush1.msra.mxu0 0.0
        %585 = vmatprep.subr.mxu0 0.0
        %586 = vmatpush1.msra.mxu0 0.0
        %587 = vmatprep.subr.mxu0 0.0
        %588 = vmatpush1.msra.mxu0 0.0
        %589 = vmatprep.subr.mxu0 0.0
        %590 = vmatpush1.msra.mxu0 0.0
        %591 = vmatprep.mubr.f32.mxu0 %v333
        %592 = vmatmul.mubr.f32.gmra.mrb[0].mxu0 %v201
        %v593 = vpop.f32.mrb[0].mxu0
        %v594 = vadd.f32 0.0, %v593
        %v595 = vpop.f32.mrb[0].mxu0
        %596 = vmatprep.mubr.f32.mxu0 %v336
        %597 = vmatmul.mubr.f32.gmra.mrb[0].mxu0 %v203
        %v598 = vpop.f32.mrb[0].mxu0
        %v599 = vadd.f32 0.0, %v598
        %v600 = vpop.f32.mrb[0].mxu0
        %601 = vmatprep.mubr.f32.mxu0 %v339
        %602 = vmatmul.mubr.f32.gmra.mrb[0].mxu0 %v205
        %v603 = vpop.f32.mrb[0].mxu0
        %v604 = vadd.f32 0.0, %v603
        %v605 = vpop.f32.mrb[0].mxu0
        %606 = vmatprep.mubr.f32.mxu0 %v342
        %607 = vmatmul.mubr.f32.gmra.mrb[0].mxu0 %v207
        %v608 = vpop.f32.mrb[0].mxu0
        %v609 = vadd.f32 0.0, %v608
        %v610 = vpop.f32.mrb[0].mxu0
        %611 = vmatprep.mubr.f32.mxu0 %v345
        %612 = vmatmul.mubr.f32.gmra.mrb[0].mxu0 %v209
        %v613 = vpop.f32.mrb[0].mxu0
        %v614 = vadd.f32 0.0, %v613
        %v615 = vpop.f32.mrb[0].mxu0
        %616 = vmatprep.mubr.f32.mxu0 %v348
        %617 = vmatmul.mubr.f32.gmra.mrb[0].mxu0 %v211
        %v618 = vpop.f32.mrb[0].mxu0
        %v619 = vadd.f32 0.0, %v618
        %v620 = vpop.f32.mrb[0].mxu0
        %621 = vmatprep.mubr.f32.mxu0 %v351
        %622 = vmatmul.mubr.f32.gmra.mrb[0].mxu0 %v213
        %v623 = vpop.f32.mrb[0].mxu0
        %v624 = vadd.f32 0.0, %v623
        %v625 = vpop.f32.mrb[0].mxu0
        %626 = vmatprep.mubr.f32.mxu0 %v354
        %627 = vmatmul.mubr.f32.gmra.mrb[0].mxu0 %v215
        %v628 = vpop.f32.mrb[0].mxu0
        %v629 = vadd.f32 0.0, %v628
        %v630 = vpop.f32.mrb[0].mxu0
        %631 = vmatprep.mubr.f32.mxu0 %v357
        %632 = vmatmul.mubr.f32.gmra.mrb[0].mxu0 %v217
        %v633 = vpop.f32.mrb[0].mxu0
        %v634 = vadd.f32 0.0, %v633
        %v635 = vpop.f32.mrb[0].mxu0
        %636 = vmatprep.mubr.f32.mxu0 %v360
        %637 = vmatmul.mubr.f32.gmra.mrb[0].mxu0 %v219
        %v638 = vpop.f32.mrb[0].mxu0
        %v639 = vadd.f32 0.0, %v638
        %v640 = vpop.f32.mrb[0].mxu0
        %641 = vmatprep.mubr.f32.mxu0 %v363
        %642 = vmatmul.mubr.f32.gmra.mrb[0].mxu0 %v221
        %v643 = vpop.f32.mrb[0].mxu0
        %v644 = vadd.f32 0.0, %v643
        %v645 = vpop.f32.mrb[0].mxu0
        %646 = vmatprep.mubr.f32.mxu0 %v366
        %647 = vmatmul.mubr.f32.gmra.mrb[0].mxu0 %v223
        %v648 = vpop.f32.mrb[0].mxu0
        %v649 = vadd.f32 0.0, %v648
        %v650 = vpop.f32.mrb[0].mxu0
        %651 = vmatprep.mubr.f32.mxu0 %v369
        %652 = vmatmul.mubr.f32.gmra.mrb[0].mxu0 %v225
        %v653 = vpop.f32.mrb[0].mxu0
        %v654 = vadd.f32 0.0, %v653
        %v655 = vpop.f32.mrb[0].mxu0
        %656 = vmatprep.mubr.f32.mxu0 %v372
        %657 = vmatmul.mubr.f32.gmra.mrb[0].mxu0 %v227
        %v658 = vpop.f32.mrb[0].mxu0
        %v659 = vadd.f32 0.0, %v658
        %v660 = vpop.f32.mrb[0].mxu0
        %661 = vmatprep.mubr.f32.mxu0 %v375
        %662 = vmatmul.mubr.f32.gmra.mrb[0].mxu0 %v229
        %v663 = vpop.f32.mrb[0].mxu0
        %v664 = vadd.f32 0.0, %v663
        %v665 = vpop.f32.mrb[0].mxu0
        %666 = vmatprep.mubr.f32.mxu0 %v378
        %667 = vmatmul.mubr.f32.gmra.mrb[0].mxu0 %v231
        %v668 = vpop.f32.mrb[0].mxu0
        %v669 = vadd.f32 0.0, %v668
        %v670 = vpop.f32.mrb[0].mxu0
        %671 = vmatprep.mubr.f32.mxu0 %v381
        %672 = vmatmul.mubr.f32.gmra.mrb[0].mxu0 %v233
        %v673 = vpop.f32.mrb[0].mxu0
        %v674 = vadd.f32 0.0, %v673
        %v675 = vpop.f32.mrb[0].mxu0
        %676 = vmatprep.mubr.f32.mxu0 %v384
        %677 = vmatmul.mubr.f32.gmra.mrb[0].mxu0 %v235
        %v678 = vpop.f32.mrb[0].mxu0
        %v679 = vadd.f32 0.0, %v678
        %v680 = vpop.f32.mrb[0].mxu0
        %681 = vmatprep.mubr.f32.mxu0 %v387
        %682 = vmatmul.mubr.f32.gmra.mrb[0].mxu0 %v237
        %v683 = vpop.f32.mrb[0].mxu0
        %v684 = vadd.f32 0.0, %v683
        %v685 = vpop.f32.mrb[0].mxu0
        %686 = vmatprep.mubr.f32.mxu0 %v390
        %687 = vmatmul.mubr.f32.gmra.mrb[0].mxu0 %v239
        %v688 = vpop.f32.mrb[0].mxu0
        %v689 = vadd.f32 0.0, %v688
        %v690 = vpop.f32.mrb[0].mxu0
        %691 = vmatprep.mubr.f32.mxu0 %v393
        %692 = vmatmul.mubr.f32.gmra.mrb[0].mxu0 %v241
        %v693 = vpop.f32.mrb[0].mxu0
        %v694 = vadd.f32 0.0, %v693
        %v695 = vpop.f32.mrb[0].mxu0
        %696 = vmatprep.mubr.f32.mxu0 %v396
        %697 = vmatmul.mubr.f32.gmra.mrb[0].mxu0 %v243
        %v698 = vpop.f32.mrb[0].mxu0
        %v699 = vadd.f32 0.0, %v698
        %v700 = vpop.f32.mrb[0].mxu0
        %701 = vmatprep.mubr.f32.mxu0 %v399
        %702 = vmatmul.mubr.f32.gmra.mrb[0].mxu0 %v245
        %v703 = vpop.f32.mrb[0].mxu0
        %v704 = vadd.f32 0.0, %v703
        %v705 = vpop.f32.mrb[0].mxu0
        %706 = vmatprep.mubr.f32.mxu0 %v402
        %707 = vmatmul.mubr.f32.gmra.mrb[0].mxu0 %v247
        %v708 = vpop.f32.mrb[0].mxu0
        %v709 = vadd.f32 0.0, %v708
        %v710 = vpop.f32.mrb[0].mxu0
        %711 = vmatprep.mubr.f32.mxu0 %v405
        %712 = vmatmul.mubr.f32.gmra.mrb[0].mxu0 %v249
        %v713 = vpop.f32.mrb[0].mxu0
        %v714 = vadd.f32 0.0, %v713
        %v715 = vpop.f32.mrb[0].mxu0
        %716 = vmatprep.mubr.f32.mxu0 %v408
        %717 = vmatmul.mubr.f32.gmra.mrb[0].mxu0 %v251
        %v718 = vpop.f32.mrb[0].mxu0
        %v719 = vadd.f32 0.0, %v718
        %v720 = vpop.f32.mrb[0].mxu0
        %721 = vmatprep.mubr.f32.mxu0 %v411
        %722 = vmatmul.mubr.f32.gmra.mrb[0].mxu0 %v253
        %v723 = vpop.f32.mrb[0].mxu0
        %v724 = vadd.f32 0.0, %v723
        %v725 = vpop.f32.mrb[0].mxu0
        %726 = vmatprep.mubr.f32.mxu0 %v414
        %727 = vmatmul.mubr.f32.gmra.mrb[0].mxu0 %v255
        %v728 = vpop.f32.mrb[0].mxu0
        %v729 = vadd.f32 0.0, %v728
        %v730 = vpop.f32.mrb[0].mxu0
        %731 = vmatprep.mubr.f32.mxu0 %v417
        %732 = vmatmul.mubr.f32.gmra.mrb[0].mxu0 %v257
        %v733 = vpop.f32.mrb[0].mxu0
        %v734 = vadd.f32 0.0, %v733
        %v735 = vpop.f32.mrb[0].mxu0
        %736 = vmatprep.mubr.f32.mxu0 %v420
        %737 = vmatmul.mubr.f32.gmra.mrb[0].mxu0 %v259
        %v738 = vpop.f32.mrb[0].mxu0
        %v739 = vadd.f32 0.0, %v738
        %v740 = vpop.f32.mrb[0].mxu0
        %741 = vmatprep.mubr.f32.mxu0 %v423
        %742 = vmatmul.mubr.f32.gmra.mrb[0].mxu0 %v261
        %v743 = vpop.f32.mrb[0].mxu0
        %v744 = vadd.f32 0.0, %v743
        %v745 = vpop.f32.mrb[0].mxu0
        %746 = vmatprep.mubr.f32.mxu0 %v426
        %747 = vmatmul.mubr.f32.gmra.mrb[0].mxu0 %v263
        %v748 = vpop.f32.mrb[0].mxu0
        %v749 = vadd.f32 0.0, %v748
        %v750 = vpop.f32.mrb[0].mxu0
        %751 = vmatprep.mubr.f32.mxu0 %v429
        %752 = vmatmul.mubr.f32.gmra.mrb[0].mxu0 %v265
        %v753 = vpop.f32.mrb[0].mxu0
        %v754 = vadd.f32 0.0, %v753
        %v755 = vpop.f32.mrb[0].mxu0
        %756 = vmatprep.mubr.f32.mxu0 %v432
        %757 = vmatmul.mubr.f32.gmra.mrb[0].mxu0 %v267
        %v758 = vpop.f32.mrb[0].mxu0
        %v759 = vadd.f32 0.0, %v758
        %v760 = vpop.f32.mrb[0].mxu0
        %761 = vmatprep.mubr.f32.mxu0 %v435
        %762 = vmatmul.mubr.f32.gmra.mrb[0].mxu0 %v269
        %v763 = vpop.f32.mrb[0].mxu0
        %v764 = vadd.f32 0.0, %v763
        %v765 = vpop.f32.mrb[0].mxu0
        %766 = vmatprep.mubr.f32.mxu0 %v438
        %767 = vmatmul.mubr.f32.gmra.mrb[0].mxu0 %v271
        %v768 = vpop.f32.mrb[0].mxu0
        %v769 = vadd.f32 0.0, %v768
        %v770 = vpop.f32.mrb[0].mxu0
        %771 = vmatprep.mubr.f32.mxu0 %v441
        %772 = vmatmul.mubr.f32.gmra.mrb[0].mxu0 %v273
        %v773 = vpop.f32.mrb[0].mxu0
        %v774 = vadd.f32 0.0, %v773
        %v775 = vpop.f32.mrb[0].mxu0
        %776 = vmatprep.mubr.f32.mxu0 %v444
        %777 = vmatmul.mubr.f32.gmra.mrb[0].mxu0 %v275
        %v778 = vpop.f32.mrb[0].mxu0
        %v779 = vadd.f32 0.0, %v778
        %v780 = vpop.f32.mrb[0].mxu0
        %781 = vmatprep.mubr.f32.mxu0 %v447
        %782 = vmatmul.mubr.f32.gmra.mrb[0].mxu0 %v277
        %v783 = vpop.f32.mrb[0].mxu0
        %v784 = vadd.f32 0.0, %v783
        %v785 = vpop.f32.mrb[0].mxu0
        %786 = vmatprep.mubr.f32.mxu0 %v450
        %787 = vmatmul.mubr.f32.gmra.mrb[0].mxu0 %v279
        %v788 = vpop.f32.mrb[0].mxu0
        %v789 = vadd.f32 0.0, %v788
        %v790 = vpop.f32.mrb[0].mxu0
        %791 = vmatprep.mubr.f32.mxu0 %v453
        %792 = vmatmul.mubr.f32.gmra.mrb[0].mxu0 %v281
        %v793 = vpop.f32.mrb[0].mxu0
        %v794 = vadd.f32 0.0, %v793
        %v795 = vpop.f32.mrb[0].mxu0
        %796 = vmatprep.mubr.f32.mxu0 %v456
        %797 = vmatmul.mubr.f32.gmra.mrb[0].mxu0 %v283
        %v798 = vpop.f32.mrb[0].mxu0
        %v799 = vadd.f32 0.0, %v798
        %v800 = vpop.f32.mrb[0].mxu0
        %801 = vmatprep.mubr.f32.mxu0 %v459
        %802 = vmatmul.mubr.f32.gmra.mrb[0].mxu0 %v285
        %v803 = vpop.f32.mrb[0].mxu0
        %v804 = vadd.f32 0.0, %v803
        %v805 = vpop.f32.mrb[0].mxu0
        %806 = vmatprep.mubr.f32.mxu0 %v462
        %807 = vmatmul.mubr.f32.gmra.mrb[0].mxu0 %v287
        %v808 = vpop.f32.mrb[0].mxu0
        %v809 = vadd.f32 0.0, %v808
        %v810 = vpop.f32.mrb[0].mxu0
        %811 = vmatprep.mubr.f32.mxu0 %v465
        %812 = vmatmul.mubr.f32.gmra.mrb[0].mxu0 %v289
        %v813 = vpop.f32.mrb[0].mxu0
        %v814 = vadd.f32 0.0, %v813
        %v815 = vpop.f32.mrb[0].mxu0
        %816 = vmatprep.mubr.f32.mxu0 %v468
        %817 = vmatmul.mubr.f32.gmra.mrb[0].mxu0 %v291
        %v818 = vpop.f32.mrb[0].mxu0
        %v819 = vadd.f32 0.0, %v818
        %v820 = vpop.f32.mrb[0].mxu0
        %821 = vmatprep.mubr.f32.mxu0 %v471
        %822 = vmatmul.mubr.f32.gmra.mrb[0].mxu0 %v293
        %v823 = vpop.f32.mrb[0].mxu0
        %v824 = vadd.f32 0.0, %v823
        %v825 = vpop.f32.mrb[0].mxu0
        %826 = vmatprep.mubr.f32.mxu0 %v474
        %827 = vmatmul.mubr.f32.gmra.mrb[0].mxu0 %v295
        %v828 = vpop.f32.mrb[0].mxu0
        %v829 = vadd.f32 0.0, %v828
        %v830 = vpop.f32.mrb[0].mxu0
        %831 = vmatprep.mubr.f32.mxu0 %v477
        %832 = vmatmul.mubr.f32.gmra.mrb[0].mxu0 %v297
        %v833 = vpop.f32.mrb[0].mxu0
        %v834 = vadd.f32 0.0, %v833
        %v835 = vpop.f32.mrb[0].mxu0
        %836 = vmatprep.mubr.f32.mxu0 %v480
        %837 = vmatmul.mubr.f32.gmra.mrb[0].mxu0 %v299
        %v838 = vpop.f32.mrb[0].mxu0
        %v839 = vadd.f32 0.0, %v838
        %v840 = vpop.f32.mrb[0].mxu0
        %841 = vmatprep.mubr.f32.mxu0 %v483
        %842 = vmatmul.mubr.f32.gmra.mrb[0].mxu0 %v301
        %v843 = vpop.f32.mrb[0].mxu0
        %v844 = vadd.f32 0.0, %v843
        %v845 = vpop.f32.mrb[0].mxu0
        %846 = vmatprep.mubr.f32.mxu0 %v486
        %847 = vmatmul.mubr.f32.gmra.mrb[0].mxu0 %v303
        %v848 = vpop.f32.mrb[0].mxu0
        %v849 = vadd.f32 0.0, %v848
        %v850 = vpop.f32.mrb[0].mxu0
        %851 = vmatprep.mubr.f32.mxu0 %v489
        %852 = vmatmul.mubr.f32.gmra.mrb[0].mxu0 %v305
        %v853 = vpop.f32.mrb[0].mxu0
        %v854 = vadd.f32 0.0, %v853
        %v855 = vpop.f32.mrb[0].mxu0
        %856 = vmatprep.mubr.f32.mxu0 %v492
        %857 = vmatmul.mubr.f32.gmra.mrb[0].mxu0 %v307
        %v858 = vpop.f32.mrb[0].mxu0
        %v859 = vadd.f32 0.0, %v858
        %v860 = vpop.f32.mrb[0].mxu0
        %861 = vmatprep.mubr.f32.mxu0 %v495
        %862 = vmatmul.mubr.f32.gmra.mrb[0].mxu0 %v309
        %v863 = vpop.f32.mrb[0].mxu0
        %v864 = vadd.f32 0.0, %v863
        %v865 = vpop.f32.mrb[0].mxu0
        %866 = vmatprep.mubr.f32.mxu0 %v498
        %867 = vmatmul.mubr.f32.gmra.mrb[0].mxu0 %v311
        %v868 = vpop.f32.mrb[0].mxu0
        %v869 = vadd.f32 0.0, %v868
        %v870 = vpop.f32.mrb[0].mxu0
        %871 = vmatprep.mubr.f32.mxu0 %v501
        %872 = vmatmul.mubr.f32.gmra.mrb[0].mxu0 %v313
        %v873 = vpop.f32.mrb[0].mxu0
        %v874 = vadd.f32 0.0, %v873
        %v875 = vpop.f32.mrb[0].mxu0
        %876 = vmatprep.mubr.f32.mxu0 %v504
        %877 = vmatmul.mubr.f32.gmra.mrb[0].mxu0 %v315
        %v878 = vpop.f32.mrb[0].mxu0
        %v879 = vadd.f32 0.0, %v878
        %v880 = vpop.f32.mrb[0].mxu0
        %881 = vmatprep.mubr.f32.mxu0 %v507
        %882 = vmatmul.mubr.f32.gmra.mrb[0].mxu0 %v317
        %v883 = vpop.f32.mrb[0].mxu0
        %v884 = vadd.f32 0.0, %v883
        %v885 = vpop.f32.mrb[0].mxu0
        %886 = vmatprep.mubr.f32.mxu0 %v510
        %887 = vmatmul.mubr.f32.gmra.mrb[0].mxu0 %v319
        %v888 = vpop.f32.mrb[0].mxu0
        %v889 = vadd.f32 0.0, %v888
        %v890 = vpop.f32.mrb[0].mxu0
        %891 = vmatprep.mubr.f32.mxu0 %v513
        %892 = vmatmul.mubr.f32.gmra.mrb[0].mxu0 %v321
        %v893 = vpop.f32.mrb[0].mxu0
        %v894 = vadd.f32 0.0, %v893
        %v895 = vpop.f32.mrb[0].mxu0
        %896 = vmatprep.mubr.f32.mxu0 %v516
        %897 = vmatmul.mubr.f32.gmra.mrb[0].mxu0 %v323
        %v898 = vpop.f32.mrb[0].mxu0
        %v899 = vadd.f32 0.0, %v898
        %v900 = vpop.f32.mrb[0].mxu0
        %901 = vmatprep.mubr.f32.mxu0 %v519
        %902 = vmatmul.mubr.f32.gmra.mrb[0].mxu0 %v325
        %v903 = vpop.f32.mrb[0].mxu0
        %v904 = vadd.f32 0.0, %v903
        %v905 = vpop.f32.mrb[0].mxu0
        %906 = vmatprep.mubr.f32.mxu0 %v522
        %907 = vmatmul.mubr.f32.gmra.mrb[0].mxu0 %v327
        %v908 = vpop.f32.mrb[0].mxu0
        %v909 = vadd.f32 0.0, %v908
        %v910 = vpop.f32.mrb[0].mxu0
        %911 = vmatprep.mubr.f32.mxu0 %v525
        %912 = vmatmul.mubr.f32.gmra.mrb[0].mxu0 %v329
        %v913 = vpop.f32.mrb[0].mxu0
        %v914 = vadd.f32 0.0, %v913
        %v915 = vpop.f32.mrb[0].mxu0
        %916 = vdwg.mxu0
        %917 = vst [vmem:[%s150] sm:$0xff] %v594
        %918 = vst [vmem:[%s150 + $0x8] sm:$0xff] %v599
        %919 = vst [vmem:[%s150 + $0x10] sm:$0xff] %v604
        %920 = vst [vmem:[%s150 + $0x18] sm:$0xff] %v609
        %921 = vst [vmem:[%s150 + $0x20] sm:$0xff] %v614
        %922 = vst [vmem:[%s150 + $0x28] sm:$0xff] %v619
        %923 = vst [vmem:[%s150 + $0x30] sm:$0xff] %v624
        %924 = vst [vmem:[%s150 + $0x38] sm:$0xff] %v629
        %925 = vst [vmem:[%s150 + $0x40] sm:$0xff] %v634
        %926 = vst [vmem:[%s150 + $0x48] sm:$0xff] %v639
        %927 = vst [vmem:[%s150 + $0x50] sm:$0xff] %v644
        %928 = vst [vmem:[%s150 + $0x58] sm:$0xff] %v649
        %929 = vst [vmem:[%s150 + $0x60] sm:$0xff] %v654
        %930 = vst [vmem:[%s150 + $0x68] sm:$0xff] %v659
        %931 = vst [vmem:[%s150 + $0x70] sm:$0xff] %v664
        %932 = vst [vmem:[%s150 + $0x78] sm:$0xff] %v669
        %933 = vst [vmem:[%s150 + $0x80] sm:$0xff] %v674
        %934 = vst [vmem:[%s150 + $0x88] sm:$0xff] %v679
        %935 = vst [vmem:[%s150 + $0x90] sm:$0xff] %v684
        %936 = vst [vmem:[%s150 + $0x98] sm:$0xff] %v689
        %937 = vst [vmem:[%s150 + $0xa0] sm:$0xff] %v694
        %938 = vst [vmem:[%s150 + $0xa8] sm:$0xff] %v699
        %939 = vst [vmem:[%s150 + $0xb0] sm:$0xff] %v704
        %940 = vst [vmem:[%s150 + $0xb8] sm:$0xff] %v709
        %941 = vst [vmem:[%s150 + $0xc0] sm:$0xff] %v714
        %942 = vst [vmem:[%s150 + $0xc8] sm:$0xff] %v719
        %943 = vst [vmem:[%s150 + $0xd0] sm:$0xff] %v724
        %944 = vst [vmem:[%s150 + $0xd8] sm:$0xff] %v729
        %945 = vst [vmem:[%s150 + $0xe0] sm:$0xff] %v734
        %946 = vst [vmem:[%s150 + $0xe8] sm:$0xff] %v739
        %947 = vst [vmem:[%s150 + $0xf0] sm:$0xff] %v744
        %948 = vst [vmem:[%s150 + $0xf8] sm:$0xff] %v749
        %949 = vst [vmem:[%s150 + $0x100] sm:$0xff] %v754
        %950 = vst [vmem:[%s150 + $0x108] sm:$0xff] %v759
        %951 = vst [vmem:[%s150 + $0x110] sm:$0xff] %v764
        %952 = vst [vmem:[%s150 + $0x118] sm:$0xff] %v769
        %953 = vst [vmem:[%s150 + $0x120] sm:$0xff] %v774
        %954 = vst [vmem:[%s150 + $0x128] sm:$0xff] %v779
        %955 = vst [vmem:[%s150 + $0x130] sm:$0xff] %v784
        %956 = vst [vmem:[%s150 + $0x138] sm:$0xff] %v789
        %957 = vst [vmem:[%s150 + $0x140] sm:$0xff] %v794
        %958 = vst [vmem:[%s150 + $0x148] sm:$0xff] %v799
        %959 = vst [vmem:[%s150 + $0x150] sm:$0xff] %v804
        %960 = vst [vmem:[%s150 + $0x158] sm:$0xff] %v809
        %961 = vst [vmem:[%s150 + $0x160] sm:$0xff] %v814
        %962 = vst [vmem:[%s150 + $0x168] sm:$0xff] %v819
        %963 = vst [vmem:[%s150 + $0x170] sm:$0xff] %v824
        %964 = vst [vmem:[%s150 + $0x178] sm:$0xff] %v829
        %965 = vst [vmem:[%s150 + $0x180] sm:$0xff] %v834
        %966 = vst [vmem:[%s150 + $0x188] sm:$0xff] %v839
        %967 = vst [vmem:[%s150 + $0x190] sm:$0xff] %v844
        %968 = vst [vmem:[%s150 + $0x198] sm:$0xff] %v849
        %969 = vst [vmem:[%s150 + $0x1a0] sm:$0xff] %v854
        %970 = vst [vmem:[%s150 + $0x1a8] sm:$0xff] %v859
        %971 = vst [vmem:[%s150 + $0x1b0] sm:$0xff] %v864
        %972 = vst [vmem:[%s150 + $0x1b8] sm:$0xff] %v869
        %973 = vst [vmem:[%s150 + $0x1c0] sm:$0xff] %v874
        %974 = vst [vmem:[%s150 + $0x1c8] sm:$0xff] %v879
        %975 = vst [vmem:[%s150 + $0x1d0] sm:$0xff] %v884
        %976 = vst [vmem:[%s150 + $0x1d8] sm:$0xff] %v889
        %977 = vst [vmem:[%s150 + $0x1e0] sm:$0xff] %v894
        %978 = vst [vmem:[%s150 + $0x1e8] sm:$0xff] %v899
        %979 = vst [vmem:[%s150 + $0x1f0] sm:$0xff] %v904
        %980 = vst [vmem:[%s150 + $0x1f8] sm:$0xff] %v909
        %981 = vst [vmem:[%s150 + $0x200] sm:$0xff] %v914
        %s982 = scalar_lea.vmem %s0, 1040
        %v983 = vld [vmem:[%s982] sm:$0xff]
        %v984 = vld [vmem:[%s982 + $0x8] sm:$0xff]
        %v985 = vld [vmem:[%s982 + $0x10] sm:$0xff]
        %v986 = vld [vmem:[%s982 + $0x18] sm:$0xff]
        %v987 = vld [vmem:[%s982 + $0x20] sm:$0xff]
        %v988 = vld [vmem:[%s982 + $0x28] sm:$0xff]
        %v989 = vld [vmem:[%s982 + $0x30] sm:$0xff]
        %v990 = vld [vmem:[%s982 + $0x38] sm:$0xff]
        %v991 = vld [vmem:[%s982 + $0x40] sm:$0xff]
        %v992 = vld [vmem:[%s982 + $0x48] sm:$0xff]
        %v993 = vld [vmem:[%s982 + $0x50] sm:$0xff]
        %v994 = vld [vmem:[%s982 + $0x58] sm:$0xff]
        %v995 = vld [vmem:[%s982 + $0x60] sm:$0xff]
        %v996 = vld [vmem:[%s982 + $0x68] sm:$0xff]
        %v997 = vld [vmem:[%s982 + $0x70] sm:$0xff]
        %v998 = vld [vmem:[%s982 + $0x78] sm:$0xff]
        %v999 = vld [vmem:[%s982 + $0x80] sm:$0xff]
        %v1000 = vld [vmem:[%s982 + $0x88] sm:$0xff]
        %v1001 = vld [vmem:[%s982 + $0x90] sm:$0xff]
        %v1002 = vld [vmem:[%s982 + $0x98] sm:$0xff]
        %v1003 = vld [vmem:[%s982 + $0xa0] sm:$0xff]
        %v1004 = vld [vmem:[%s982 + $0xa8] sm:$0xff]
        %v1005 = vld [vmem:[%s982 + $0xb0] sm:$0xff]
        %v1006 = vld [vmem:[%s982 + $0xb8] sm:$0xff]
        %v1007 = vld [vmem:[%s982 + $0xc0] sm:$0xff]
        %v1008 = vld [vmem:[%s982 + $0xc8] sm:$0xff]
        %v1009 = vld [vmem:[%s982 + $0xd0] sm:$0xff]
        %v1010 = vld [vmem:[%s982 + $0xd8] sm:$0xff]
        %v1011 = vld [vmem:[%s982 + $0xe0] sm:$0xff]
        %v1012 = vld [vmem:[%s982 + $0xe8] sm:$0xff]
        %v1013 = vld [vmem:[%s982 + $0xf0] sm:$0xff]
        %v1014 = vld [vmem:[%s982 + $0xf8] sm:$0xff]
        %v1015 = vld [vmem:[%s982 + $0x100] sm:$0xff]
        %v1016 = vld [vmem:[%s982 + $0x108] sm:$0xff]
        %v1017 = vld [vmem:[%s982 + $0x110] sm:$0xff]
        %v1018 = vld [vmem:[%s982 + $0x118] sm:$0xff]
        %v1019 = vld [vmem:[%s982 + $0x120] sm:$0xff]
        %v1020 = vld [vmem:[%s982 + $0x128] sm:$0xff]
        %v1021 = vld [vmem:[%s982 + $0x130] sm:$0xff]
        %v1022 = vld [vmem:[%s982 + $0x138] sm:$0xff]
        %v1023 = vld [vmem:[%s982 + $0x140] sm:$0xff]
        %v1024 = vld [vmem:[%s982 + $0x148] sm:$0xff]
        %v1025 = vld [vmem:[%s982 + $0x150] sm:$0xff]
        %v1026 = vld [vmem:[%s982 + $0x158] sm:$0xff]
        %v1027 = vld [vmem:[%s982 + $0x160] sm:$0xff]
        %v1028 = vld [vmem:[%s982 + $0x168] sm:$0xff]
        %v1029 = vld [vmem:[%s982 + $0x170] sm:$0xff]
        %v1030 = vld [vmem:[%s982 + $0x178] sm:$0xff]
        %v1031 = vld [vmem:[%s982 + $0x180] sm:$0xff]
        %v1032 = vld [vmem:[%s982 + $0x188] sm:$0xff]
        %v1033 = vld [vmem:[%s982 + $0x190] sm:$0xff]
        %v1034 = vld [vmem:[%s982 + $0x198] sm:$0xff]
        %v1035 = vld [vmem:[%s982 + $0x1a0] sm:$0xff]
        %v1036 = vld [vmem:[%s982 + $0x1a8] sm:$0xff]
        %v1037 = vld [vmem:[%s982 + $0x1b0] sm:$0xff]
        %v1038 = vld [vmem:[%s982 + $0x1b8] sm:$0xff]
        %v1039 = vld [vmem:[%s982 + $0x1c0] sm:$0xff]
        %v1040 = vld [vmem:[%s982 + $0x1c8] sm:$0xff]
        %v1041 = vld [vmem:[%s982 + $0x1d0] sm:$0xff]
        %v1042 = vld [vmem:[%s982 + $0x1d8] sm:$0xff]
        %v1043 = vld [vmem:[%s982 + $0x1e0] sm:$0xff]
        %v1044 = vld [vmem:[%s982 + $0x1e8] sm:$0xff]
        %v1045 = vld [vmem:[%s982 + $0x1f0] sm:$0xff]
        %v1046 = vld [vmem:[%s982 + $0x1f8] sm:$0xff]
        %v1047 = vld [vmem:[%s982 + $0x200] sm:$0xff]
        %v1048 = vld [vmem:[%s982 + $0x208] sm:$0xff]
        %v1049 = vld [vmem:[%s982 + $0x210] sm:$0xff]
        %v1050 = vld [vmem:[%s982 + $0x218] sm:$0xff]
        %v1051 = vld [vmem:[%s982 + $0x220] sm:$0xff]
        %v1052 = vld [vmem:[%s982 + $0x228] sm:$0xff]
        %v1053 = vld [vmem:[%s982 + $0x230] sm:$0xff]
        %v1054 = vld [vmem:[%s982 + $0x238] sm:$0xff]
        %v1055 = vld [vmem:[%s982 + $0x240] sm:$0xff]
        %v1056 = vld [vmem:[%s982 + $0x248] sm:$0xff]
        %v1057 = vld [vmem:[%s982 + $0x250] sm:$0xff]
        %v1058 = vld [vmem:[%s982 + $0x258] sm:$0xff]
        %v1059 = vld [vmem:[%s982 + $0x260] sm:$0xff]
        %v1060 = vld [vmem:[%s982 + $0x268] sm:$0xff]
        %v1061 = vld [vmem:[%s982 + $0x270] sm:$0xff]
        %v1062 = vld [vmem:[%s982 + $0x278] sm:$0xff]
        %v1063 = vld [vmem:[%s982 + $0x280] sm:$0xff]
        %v1064 = vld [vmem:[%s982 + $0x288] sm:$0xff]
        %v1065 = vld [vmem:[%s982 + $0x290] sm:$0xff]
        %v1066 = vld [vmem:[%s982 + $0x298] sm:$0xff]
        %v1067 = vld [vmem:[%s982 + $0x2a0] sm:$0xff]
        %v1068 = vld [vmem:[%s982 + $0x2a8] sm:$0xff]
        %v1069 = vld [vmem:[%s982 + $0x2b0] sm:$0xff]
        %v1070 = vld [vmem:[%s982 + $0x2b8] sm:$0xff]
        %v1071 = vld [vmem:[%s982 + $0x2c0] sm:$0xff]
        %v1072 = vld [vmem:[%s982 + $0x2c8] sm:$0xff]
        %v1073 = vld [vmem:[%s982 + $0x2d0] sm:$0xff]
        %v1074 = vld [vmem:[%s982 + $0x2d8] sm:$0xff]
        %v1075 = vld [vmem:[%s982 + $0x2e0] sm:$0xff]
        %v1076 = vld [vmem:[%s982 + $0x2e8] sm:$0xff]
        %v1077 = vld [vmem:[%s982 + $0x2f0] sm:$0xff]
        %v1078 = vld [vmem:[%s982 + $0x2f8] sm:$0xff]
        %v1079 = vld [vmem:[%s982 + $0x300] sm:$0xff]
        %v1080 = vld [vmem:[%s982 + $0x308] sm:$0xff]
        %v1081 = vld [vmem:[%s982 + $0x310] sm:$0xff]
        %v1082 = vld [vmem:[%s982 + $0x318] sm:$0xff]
        %v1083 = vld [vmem:[%s982 + $0x320] sm:$0xff]
        %v1084 = vld [vmem:[%s982 + $0x328] sm:$0xff]
        %v1085 = vld [vmem:[%s982 + $0x330] sm:$0xff]
        %v1086 = vld [vmem:[%s982 + $0x338] sm:$0xff]
        %v1087 = vld [vmem:[%s982 + $0x340] sm:$0xff]
        %v1088 = vld [vmem:[%s982 + $0x348] sm:$0xff]
        %v1089 = vld [vmem:[%s982 + $0x350] sm:$0xff]
        %v1090 = vld [vmem:[%s982 + $0x358] sm:$0xff]
        %v1091 = vld [vmem:[%s982 + $0x360] sm:$0xff]
        %v1092 = vld [vmem:[%s982 + $0x368] sm:$0xff]
        %v1093 = vld [vmem:[%s982 + $0x370] sm:$0xff]
        %v1094 = vld [vmem:[%s982 + $0x378] sm:$0xff]
        %v1095 = vld [vmem:[%s982 + $0x380] sm:$0xff]
        %v1096 = vld [vmem:[%s982 + $0x388] sm:$0xff]
        %v1097 = vld [vmem:[%s982 + $0x390] sm:$0xff]
        %v1098 = vld [vmem:[%s982 + $0x398] sm:$0xff]
        %v1099 = vld [vmem:[%s982 + $0x3a0] sm:$0xff]
        %v1100 = vld [vmem:[%s982 + $0x3a8] sm:$0xff]
        %v1101 = vld [vmem:[%s982 + $0x3b0] sm:$0xff]
        %v1102 = vld [vmem:[%s982 + $0x3b8] sm:$0xff]
        %v1103 = vld [vmem:[%s982 + $0x3c0] sm:$0xff]
        %v1104 = vld [vmem:[%s982 + $0x3c8] sm:$0xff]
        %v1105 = vld [vmem:[%s982 + $0x3d0] sm:$0xff]
        %v1106 = vld [vmem:[%s982 + $0x3d8] sm:$0xff]
        %v1107 = vld [vmem:[%s982 + $0x3e0] sm:$0xff]
        %v1108 = vld [vmem:[%s982 + $0x3e8] sm:$0xff]
        %v1109 = vld [vmem:[%s982 + $0x3f0] sm:$0xff]
        %v1110 = vld [vmem:[%s982 + $0x3f8] sm:$0xff]
        %v1111 = vld [vmem:[%s982 + $0x400] sm:$0xff]
        %v1112 = vld [vmem:[%s982 + $0x408] sm:$0xff]
        %1153 = vrot.lane.b32.xlu0 %v161, 127
        %v1154 = vpop.permute.xlu0 %1153
        %1155 = vrot.lane.b32.xlu0 %v162, 127
        %v1156 = vpop.permute.xlu0 %1155
        %1157 = vrot.lane.b32.xlu0 %v163, 127
        %v1158 = vpop.permute.xlu0 %1157
        %1159 = vrot.lane.b32.xlu0 %v164, 127
        %v1160 = vpop.permute.xlu0 %1159
        %1161 = vrot.lane.b32.xlu0 %v165, 127
        %v1162 = vpop.permute.xlu0 %1161
        %1163 = vrot.lane.b32.xlu0 %v166, 127
        %v1164 = vpop.permute.xlu0 %1163
        %1165 = vrot.lane.b32.xlu0 %v167, 127
        %v1166 = vpop.permute.xlu0 %1165
        %1167 = vrot.lane.b32.xlu0 %v168, 127
        %v1168 = vpop.permute.xlu0 %1167
        %1169 = vrot.lane.b32.xlu0 %v169, 127
        %v1170 = vpop.permute.xlu0 %1169
        %1171 = vrot.lane.b32.xlu0 %v170, 127
        %v1172 = vpop.permute.xlu0 %1171
        %1173 = vrot.lane.b32.xlu0 %v171, 127
        %v1174 = vpop.permute.xlu0 %1173
        %1175 = vrot.lane.b32.xlu0 %v172, 127
        %v1176 = vpop.permute.xlu0 %1175
        %1177 = vrot.lane.b32.xlu0 %v173, 127
        %v1178 = vpop.permute.xlu0 %1177
        %1179 = vrot.lane.b32.xlu0 %v174, 127
        %v1180 = vpop.permute.xlu0 %1179
        %1181 = vrot.lane.b32.xlu0 %v175, 127
        %v1182 = vpop.permute.xlu0 %1181
        %1183 = vrot.lane.b32.xlu0 %v176, 127
        %v1184 = vpop.permute.xlu0 %1183
        %1185 = vrot.lane.b32.xlu0 %v177, 127
        %v1186 = vpop.permute.xlu0 %1185
        %1187 = vrot.lane.b32.xlu0 %v178, 127
        %v1188 = vpop.permute.xlu0 %1187
        %1189 = vrot.lane.b32.xlu0 %v179, 127
        %v1190 = vpop.permute.xlu0 %1189
        %1191 = vrot.lane.b32.xlu0 %v180, 127
        %v1192 = vpop.permute.xlu0 %1191
        %1193 = vrot.lane.b32.xlu0 %v181, 127
        %v1194 = vpop.permute.xlu0 %1193
        %1195 = vrot.lane.b32.xlu0 %v182, 127
        %v1196 = vpop.permute.xlu0 %1195
        %1197 = vrot.lane.b32.xlu0 %v183, 127
        %v1198 = vpop.permute.xlu0 %1197
        %1199 = vrot.lane.b32.xlu0 %v184, 127
        %v1200 = vpop.permute.xlu0 %1199
        %1201 = vrot.lane.b32.xlu0 %v185, 127
        %v1202 = vpop.permute.xlu0 %1201
        %1203 = vrot.lane.b32.xlu0 %v186, 127
        %v1204 = vpop.permute.xlu0 %1203
        %1205 = vrot.lane.b32.xlu0 %v187, 127
        %v1206 = vpop.permute.xlu0 %1205
        %1207 = vrot.lane.b32.xlu0 %v188, 127
        %v1208 = vpop.permute.xlu0 %1207
        %1209 = vrot.lane.b32.xlu0 %v189, 127
        %v1210 = vpop.permute.xlu0 %1209
        %1211 = vrot.lane.b32.xlu0 %v190, 127
        %v1212 = vpop.permute.xlu0 %1211
        %1213 = vrot.lane.b32.xlu0 %v191, 127
        %v1214 = vpop.permute.xlu0 %1213
        %1215 = vrot.lane.b32.xlu0 %v192, 127
        %v1216 = vpop.permute.xlu0 %1215
        %1217 = vrot.lane.b32.xlu0 %v193, 127
        %v1218 = vpop.permute.xlu0 %1217
        %1219 = vrot.lane.b32.xlu0 %v194, 127
        %v1220 = vpop.permute.xlu0 %1219
        %1221 = vrot.lane.b32.xlu0 %v195, 127
        %v1222 = vpop.permute.xlu0 %1221
        %1223 = vrot.lane.b32.xlu0 %v196, 127
        %v1224 = vpop.permute.xlu0 %1223
        %1225 = vrot.lane.b32.xlu0 %v197, 127
        %v1226 = vpop.permute.xlu0 %1225
        %1227 = vrot.lane.b32.xlu0 %v198, 127
        %v1228 = vpop.permute.xlu0 %1227
        %1229 = vrot.lane.b32.xlu0 %v199, 127
        %v1230 = vpop.permute.xlu0 %1229
        %1231 = vrot.lane.b32.xlu0 %v200, 127
        %v1232 = vpop.permute.xlu0 %1231
        %vm1233 = vcmask 1039360
        %v1234 = vsel %vm1233, %v1154, %v1156
        %v1235 = vsel %vm1233, %v1158, %v1160
        %v1236 = vsel %vm1233, %v1162, %v1164
        %v1237 = vsel %vm1233, %v1166, %v1168
        %v1238 = vsel %vm1233, %v1170, %v1172
        %v1239 = vsel %vm1233, %v1174, %v1176
        %v1240 = vsel %vm1233, %v1178, %v1180
        %v1241 = vsel %vm1233, %v1182, %v1184
        %v1242 = vsel %vm1233, %v1186, %v1188
        %v1243 = vsel %vm1233, %v1190, %v1192
        %v1244 = vsel %vm1233, %v1194, %v1196
        %v1245 = vsel %vm1233, %v1198, %v1200
        %v1246 = vsel %vm1233, %v1202, %v1204
        %v1247 = vsel %vm1233, %v1206, %v1208
        %v1248 = vsel %vm1233, %v1210, %v1212
        %v1249 = vsel %vm1233, %v1214, %v1216
        %v1250 = vsel %vm1233, %v1218, %v1220
        %v1251 = vsel %vm1233, %v1222, %v1224
        %v1252 = vsel %vm1233, %v1226, %v1228
        %v1253 = vsel %vm1233, %v1230, %v1232
        %v1275 = vsel %vm331, %v984, 0
        %v1278 = vsel %vm331, %v986, 0
        %v1281 = vsel %vm331, %v988, 0
        %v1284 = vsel %vm331, %v990, 0
        %v1287 = vsel %vm331, %v992, 0
        %v1290 = vsel %vm331, %v994, 0
        %v1293 = vsel %vm331, %v996, 0
        %v1296 = vsel %vm331, %v998, 0
        %v1299 = vsel %vm331, %v1000, 0
        %v1302 = vsel %vm331, %v1002, 0
        %v1305 = vsel %vm331, %v1004, 0
        %v1308 = vsel %vm331, %v1006, 0
        %v1311 = vsel %vm331, %v1008, 0
        %v1314 = vsel %vm331, %v1010, 0
        %v1317 = vsel %vm331, %v1012, 0
        %v1320 = vsel %vm331, %v1014, 0
        %v1323 = vsel %vm331, %v1016, 0
        %v1326 = vsel %vm331, %v1018, 0
        %v1329 = vsel %vm331, %v1020, 0
        %v1332 = vsel %vm331, %v1022, 0
        %v1335 = vsel %vm331, %v1024, 0
        %v1338 = vsel %vm331, %v1026, 0
        %v1341 = vsel %vm331, %v1028, 0
        %v1344 = vsel %vm331, %v1030, 0
        %v1347 = vsel %vm331, %v1032, 0
        %v1350 = vsel %vm331, %v1034, 0
        %v1353 = vsel %vm331, %v1036, 0
        %v1356 = vsel %vm331, %v1038, 0
        %v1359 = vsel %vm331, %v1040, 0
        %v1362 = vsel %vm331, %v1042, 0
        %v1365 = vsel %vm331, %v1044, 0
        %v1368 = vsel %vm331, %v1046, 0
        %v1371 = vsel %vm331, %v1048, 0
        %v1374 = vsel %vm331, %v1050, 0
        %v1377 = vsel %vm331, %v1052, 0
        %v1380 = vsel %vm331, %v1054, 0
        %v1383 = vsel %vm331, %v1056, 0
        %v1386 = vsel %vm331, %v1058, 0
        %v1389 = vsel %vm331, %v1060, 0
        %v1392 = vsel %vm331, %v1062, 0
        %v1395 = vsel %vm331, %v1064, 0
        %v1398 = vsel %vm331, %v1066, 0
        %v1401 = vsel %vm331, %v1068, 0
        %v1404 = vsel %vm331, %v1070, 0
        %v1407 = vsel %vm331, %v1072, 0
        %v1410 = vsel %vm331, %v1074, 0
        %v1413 = vsel %vm331, %v1076, 0
        %v1416 = vsel %vm331, %v1078, 0
        %v1419 = vsel %vm331, %v1080, 0
        %v1422 = vsel %vm331, %v1082, 0
        %v1425 = vsel %vm331, %v1084, 0
        %v1428 = vsel %vm331, %v1086, 0
        %v1431 = vsel %vm331, %v1088, 0
        %v1434 = vsel %vm331, %v1090, 0
        %v1437 = vsel %vm331, %v1092, 0
        %v1440 = vsel %vm331, %v1094, 0
        %v1443 = vsel %vm331, %v1096, 0
        %v1446 = vsel %vm331, %v1098, 0
        %v1449 = vsel %vm331, %v1100, 0
        %v1452 = vsel %vm331, %v1102, 0
        %v1455 = vsel %vm331, %v1104, 0
        %v1458 = vsel %vm331, %v1106, 0
        %v1461 = vsel %vm331, %v1108, 0
        %v1464 = vsel %vm331, %v1110, 0
        %v1467 = vsel %vm331, %v1112, 0
        %1469 = vmatprep.subr.mxu0 0.0
        %1470 = vmatpush1.msra.mxu0 %v1234
        %1471 = vmatprep.subr.mxu0 0.0
        %1472 = vmatpush1.msra.mxu0 %v1235
        %1473 = vmatprep.subr.mxu0 0.0
        %1474 = vmatpush1.msra.mxu0 %v1236
        %1475 = vmatprep.subr.mxu0 0.0
        %1476 = vmatpush1.msra.mxu0 %v1237
        %1477 = vmatprep.subr.mxu0 0.0
        %1478 = vmatpush1.msra.mxu0 %v1238
        %1479 = vmatprep.subr.mxu0 0.0
        %1480 = vmatpush1.msra.mxu0 %v1239
        %1481 = vmatprep.subr.mxu0 0.0
        %1482 = vmatpush1.msra.mxu0 %v1240
        %1483 = vmatprep.subr.mxu0 0.0
        %1484 = vmatpush1.msra.mxu0 %v1241
        %1485 = vmatprep.subr.mxu0 0.0
        %1486 = vmatpush1.msra.mxu0 %v1242
        %1487 = vmatprep.subr.mxu0 0.0
        %1488 = vmatpush1.msra.mxu0 %v1243
        %1489 = vmatprep.subr.mxu0 0.0
        %1490 = vmatpush1.msra.mxu0 %v1244
        %1491 = vmatprep.subr.mxu0 0.0
        %1492 = vmatpush1.msra.mxu0 %v1245
        %1493 = vmatprep.subr.mxu0 0.0
        %1494 = vmatpush1.msra.mxu0 %v1246
        %1495 = vmatprep.subr.mxu0 0.0
        %1496 = vmatpush1.msra.mxu0 %v1247
        %1497 = vmatprep.subr.mxu0 0.0
        %1498 = vmatpush1.msra.mxu0 %v1248
        %1499 = vmatprep.subr.mxu0 0.0
        %1500 = vmatpush1.msra.mxu0 %v1249
        %1501 = vmatprep.subr.mxu0 0.0
        %1502 = vmatpush1.msra.mxu0 %v1250
        %1503 = vmatprep.subr.mxu0 0.0
        %1504 = vmatpush1.msra.mxu0 %v1251
        %1505 = vmatprep.subr.mxu0 0.0
        %1506 = vmatpush1.msra.mxu0 %v1252
        %1507 = vmatprep.subr.mxu0 0.0
        %1508 = vmatpush1.msra.mxu0 %v1253
        %1509 = vmatprep.subr.mxu0 0.0
        %1510 = vmatpush1.msra.mxu0 0.0
        %1511 = vmatprep.subr.mxu0 0.0
        %1512 = vmatpush1.msra.mxu0 0.0
        %1513 = vmatprep.subr.mxu0 0.0
        %1514 = vmatpush1.msra.mxu0 0.0
        %1515 = vmatprep.subr.mxu0 0.0
        %1516 = vmatpush1.msra.mxu0 0.0
        %1517 = vmatprep.subr.mxu0 0.0
        %1518 = vmatpush1.msra.mxu0 0.0
        %1519 = vmatprep.subr.mxu0 0.0
        %1520 = vmatpush1.msra.mxu0 0.0
        %1521 = vmatprep.subr.mxu0 0.0
        %1522 = vmatpush1.msra.mxu0 0.0
        %1523 = vmatprep.subr.mxu0 0.0
        %1524 = vmatpush1.msra.mxu0 0.0
        %1525 = vmatprep.subr.mxu0 0.0
        %1526 = vmatpush1.msra.mxu0 0.0
        %1527 = vmatprep.subr.mxu0 0.0
        %1528 = vmatpush1.msra.mxu0 0.0
        %1529 = vmatprep.subr.mxu0 0.0
        %1530 = vmatpush1.msra.mxu0 0.0
        %1531 = vmatprep.subr.mxu0 0.0
        %1532 = vmatpush1.msra.mxu0 0.0
        %1533 = vmatprep.mubr.f32.mxu0 %v1275
        %1534 = vmatmul.mubr.f32.gmra.mrb[0].mxu0 %v983
        %v1535 = vpop.f32.mrb[0].mxu0
        %v1536 = vadd.f32 0.0, %v1535
        %v1537 = vpop.f32.mrb[0].mxu0
        %1538 = vmatprep.mubr.f32.mxu0 %v1278
        %1539 = vmatmul.mubr.f32.gmra.mrb[0].mxu0 %v985
        %v1540 = vpop.f32.mrb[0].mxu0
        %v1541 = vadd.f32 0.0, %v1540
        %v1542 = vpop.f32.mrb[0].mxu0
        %1543 = vmatprep.mubr.f32.mxu0 %v1281
        %1544 = vmatmul.mubr.f32.gmra.mrb[0].mxu0 %v987
        %v1545 = vpop.f32.mrb[0].mxu0
        %v1546 = vadd.f32 0.0, %v1545
        %v1547 = vpop.f32.mrb[0].mxu0
        %1548 = vmatprep.mubr.f32.mxu0 %v1284
        %1549 = vmatmul.mubr.f32.gmra.mrb[0].mxu0 %v989
        %v1550 = vpop.f32.mrb[0].mxu0
        %v1551 = vadd.f32 0.0, %v1550
        %v1552 = vpop.f32.mrb[0].mxu0
        %1553 = vmatprep.mubr.f32.mxu0 %v1287
        %1554 = vmatmul.mubr.f32.gmra.mrb[0].mxu0 %v991
        %v1555 = vpop.f32.mrb[0].mxu0
        %v1556 = vadd.f32 0.0, %v1555
        %v1557 = vpop.f32.mrb[0].mxu0
        %1558 = vmatprep.mubr.f32.mxu0 %v1290
        %1559 = vmatmul.mubr.f32.gmra.mrb[0].mxu0 %v993
        %v1560 = vpop.f32.mrb[0].mxu0
        %v1561 = vadd.f32 0.0, %v1560
        %v1562 = vpop.f32.mrb[0].mxu0
        %1563 = vmatprep.mubr.f32.mxu0 %v1293
        %1564 = vmatmul.mubr.f32.gmra.mrb[0].mxu0 %v995
        %v1565 = vpop.f32.mrb[0].mxu0
        %v1566 = vadd.f32 0.0, %v1565
        %v1567 = vpop.f32.mrb[0].mxu0
        %1568 = vmatprep.mubr.f32.mxu0 %v1296
        %1569 = vmatmul.mubr.f32.gmra.mrb[0].mxu0 %v997
        %v1570 = vpop.f32.mrb[0].mxu0
        %v1571 = vadd.f32 0.0, %v1570
        %v1572 = vpop.f32.mrb[0].mxu0
        %1573 = vmatprep.mubr.f32.mxu0 %v1299
        %1574 = vmatmul.mubr.f32.gmra.mrb[0].mxu0 %v999
        %v1575 = vpop.f32.mrb[0].mxu0
        %v1576 = vadd.f32 0.0, %v1575
        %v1577 = vpop.f32.mrb[0].mxu0
        %1578 = vmatprep.mubr.f32.mxu0 %v1302
        %1579 = vmatmul.mubr.f32.gmra.mrb[0].mxu0 %v1001
        %v1580 = vpop.f32.mrb[0].mxu0
        %v1581 = vadd.f32 0.0, %v1580
        %v1582 = vpop.f32.mrb[0].mxu0
        %1583 = vmatprep.mubr.f32.mxu0 %v1305
        %1584 = vmatmul.mubr.f32.gmra.mrb[0].mxu0 %v1003
        %v1585 = vpop.f32.mrb[0].mxu0
        %v1586 = vadd.f32 0.0, %v1585
        %v1587 = vpop.f32.mrb[0].mxu0
        %1588 = vmatprep.mubr.f32.mxu0 %v1308
        %1589 = vmatmul.mubr.f32.gmra.mrb[0].mxu0 %v1005
        %v1590 = vpop.f32.mrb[0].mxu0
        %v1591 = vadd.f32 0.0, %v1590
        %v1592 = vpop.f32.mrb[0].mxu0
        %1593 = vmatprep.mubr.f32.mxu0 %v1311
        %1594 = vmatmul.mubr.f32.gmra.mrb[0].mxu0 %v1007
        %v1595 = vpop.f32.mrb[0].mxu0
        %v1596 = vadd.f32 0.0, %v1595
        %v1597 = vpop.f32.mrb[0].mxu0
        %1598 = vmatprep.mubr.f32.mxu0 %v1314
        %1599 = vmatmul.mubr.f32.gmra.mrb[0].mxu0 %v1009
        %v1600 = vpop.f32.mrb[0].mxu0
        %v1601 = vadd.f32 0.0, %v1600
        %v1602 = vpop.f32.mrb[0].mxu0
        %1603 = vmatprep.mubr.f32.mxu0 %v1317
        %1604 = vmatmul.mubr.f32.gmra.mrb[0].mxu0 %v1011
        %v1605 = vpop.f32.mrb[0].mxu0
        %v1606 = vadd.f32 0.0, %v1605
        %v1607 = vpop.f32.mrb[0].mxu0
        %1608 = vmatprep.mubr.f32.mxu0 %v1320
        %1609 = vmatmul.mubr.f32.gmra.mrb[0].mxu0 %v1013
        %v1610 = vpop.f32.mrb[0].mxu0
        %v1611 = vadd.f32 0.0, %v1610
        %v1612 = vpop.f32.mrb[0].mxu0
        %1613 = vmatprep.mubr.f32.mxu0 %v1323
        %1614 = vmatmul.mubr.f32.gmra.mrb[0].mxu0 %v1015
        %v1615 = vpop.f32.mrb[0].mxu0
        %v1616 = vadd.f32 0.0, %v1615
        %v1617 = vpop.f32.mrb[0].mxu0
        %1618 = vmatprep.mubr.f32.mxu0 %v1326
        %1619 = vmatmul.mubr.f32.gmra.mrb[0].mxu0 %v1017
        %v1620 = vpop.f32.mrb[0].mxu0
        %v1621 = vadd.f32 0.0, %v1620
        %v1622 = vpop.f32.mrb[0].mxu0
        %1623 = vmatprep.mubr.f32.mxu0 %v1329
        %1624 = vmatmul.mubr.f32.gmra.mrb[0].mxu0 %v1019
        %v1625 = vpop.f32.mrb[0].mxu0
        %v1626 = vadd.f32 0.0, %v1625
        %v1627 = vpop.f32.mrb[0].mxu0
        %1628 = vmatprep.mubr.f32.mxu0 %v1332
        %1629 = vmatmul.mubr.f32.gmra.mrb[0].mxu0 %v1021
        %v1630 = vpop.f32.mrb[0].mxu0
        %v1631 = vadd.f32 0.0, %v1630
        %v1632 = vpop.f32.mrb[0].mxu0
        %1633 = vmatprep.mubr.f32.mxu0 %v1335
        %1634 = vmatmul.mubr.f32.gmra.mrb[0].mxu0 %v1023
        %v1635 = vpop.f32.mrb[0].mxu0
        %v1636 = vadd.f32 0.0, %v1635
        %v1637 = vpop.f32.mrb[0].mxu0
        %1638 = vmatprep.mubr.f32.mxu0 %v1338
        %1639 = vmatmul.mubr.f32.gmra.mrb[0].mxu0 %v1025
        %v1640 = vpop.f32.mrb[0].mxu0
        %v1641 = vadd.f32 0.0, %v1640
        %v1642 = vpop.f32.mrb[0].mxu0
        %1643 = vmatprep.mubr.f32.mxu0 %v1341
        %1644 = vmatmul.mubr.f32.gmra.mrb[0].mxu0 %v1027
        %v1645 = vpop.f32.mrb[0].mxu0
        %v1646 = vadd.f32 0.0, %v1645
        %v1647 = vpop.f32.mrb[0].mxu0
        %1648 = vmatprep.mubr.f32.mxu0 %v1344
        %1649 = vmatmul.mubr.f32.gmra.mrb[0].mxu0 %v1029
        %v1650 = vpop.f32.mrb[0].mxu0
        %v1651 = vadd.f32 0.0, %v1650
        %v1652 = vpop.f32.mrb[0].mxu0
        %1653 = vmatprep.mubr.f32.mxu0 %v1347
        %1654 = vmatmul.mubr.f32.gmra.mrb[0].mxu0 %v1031
        %v1655 = vpop.f32.mrb[0].mxu0
        %v1656 = vadd.f32 0.0, %v1655
        %v1657 = vpop.f32.mrb[0].mxu0
        %1658 = vmatprep.mubr.f32.mxu0 %v1350
        %1659 = vmatmul.mubr.f32.gmra.mrb[0].mxu0 %v1033
        %v1660 = vpop.f32.mrb[0].mxu0
        %v1661 = vadd.f32 0.0, %v1660
        %v1662 = vpop.f32.mrb[0].mxu0
        %1663 = vmatprep.mubr.f32.mxu0 %v1353
        %1664 = vmatmul.mubr.f32.gmra.mrb[0].mxu0 %v1035
        %v1665 = vpop.f32.mrb[0].mxu0
        %v1666 = vadd.f32 0.0, %v1665
        %v1667 = vpop.f32.mrb[0].mxu0
        %1668 = vmatprep.mubr.f32.mxu0 %v1356
        %1669 = vmatmul.mubr.f32.gmra.mrb[0].mxu0 %v1037
        %v1670 = vpop.f32.mrb[0].mxu0
        %v1671 = vadd.f32 0.0, %v1670
        %v1672 = vpop.f32.mrb[0].mxu0
        %1673 = vmatprep.mubr.f32.mxu0 %v1359
        %1674 = vmatmul.mubr.f32.gmra.mrb[0].mxu0 %v1039
        %v1675 = vpop.f32.mrb[0].mxu0
        %v1676 = vadd.f32 0.0, %v1675
        %v1677 = vpop.f32.mrb[0].mxu0
        %1678 = vmatprep.mubr.f32.mxu0 %v1362
        %1679 = vmatmul.mubr.f32.gmra.mrb[0].mxu0 %v1041
        %v1680 = vpop.f32.mrb[0].mxu0
        %v1681 = vadd.f32 0.0, %v1680
        %v1682 = vpop.f32.mrb[0].mxu0
        %1683 = vmatprep.mubr.f32.mxu0 %v1365
        %1684 = vmatmul.mubr.f32.gmra.mrb[0].mxu0 %v1043
        %v1685 = vpop.f32.mrb[0].mxu0
        %v1686 = vadd.f32 0.0, %v1685
        %v1687 = vpop.f32.mrb[0].mxu0
        %1688 = vmatprep.mubr.f32.mxu0 %v1368
        %1689 = vmatmul.mubr.f32.gmra.mrb[0].mxu0 %v1045
        %v1690 = vpop.f32.mrb[0].mxu0
        %v1691 = vadd.f32 0.0, %v1690
        %v1692 = vpop.f32.mrb[0].mxu0
        %1693 = vmatprep.mubr.f32.mxu0 %v1371
        %1694 = vmatmul.mubr.f32.gmra.mrb[0].mxu0 %v1047
        %v1695 = vpop.f32.mrb[0].mxu0
        %v1696 = vadd.f32 0.0, %v1695
        %v1697 = vpop.f32.mrb[0].mxu0
        %1698 = vmatprep.mubr.f32.mxu0 %v1374
        %1699 = vmatmul.mubr.f32.gmra.mrb[0].mxu0 %v1049
        %v1700 = vpop.f32.mrb[0].mxu0
        %v1701 = vadd.f32 0.0, %v1700
        %v1702 = vpop.f32.mrb[0].mxu0
        %1703 = vmatprep.mubr.f32.mxu0 %v1377
        %1704 = vmatmul.mubr.f32.gmra.mrb[0].mxu0 %v1051
        %v1705 = vpop.f32.mrb[0].mxu0
        %v1706 = vadd.f32 0.0, %v1705
        %v1707 = vpop.f32.mrb[0].mxu0
        %1708 = vmatprep.mubr.f32.mxu0 %v1380
        %1709 = vmatmul.mubr.f32.gmra.mrb[0].mxu0 %v1053
        %v1710 = vpop.f32.mrb[0].mxu0
        %v1711 = vadd.f32 0.0, %v1710
        %v1712 = vpop.f32.mrb[0].mxu0
        %1713 = vmatprep.mubr.f32.mxu0 %v1383
        %1714 = vmatmul.mubr.f32.gmra.mrb[0].mxu0 %v1055
        %v1715 = vpop.f32.mrb[0].mxu0
        %v1716 = vadd.f32 0.0, %v1715
        %v1717 = vpop.f32.mrb[0].mxu0
        %1718 = vmatprep.mubr.f32.mxu0 %v1386
        %1719 = vmatmul.mubr.f32.gmra.mrb[0].mxu0 %v1057
        %v1720 = vpop.f32.mrb[0].mxu0
        %v1721 = vadd.f32 0.0, %v1720
        %v1722 = vpop.f32.mrb[0].mxu0
        %1723 = vmatprep.mubr.f32.mxu0 %v1389
        %1724 = vmatmul.mubr.f32.gmra.mrb[0].mxu0 %v1059
        %v1725 = vpop.f32.mrb[0].mxu0
        %v1726 = vadd.f32 0.0, %v1725
        %v1727 = vpop.f32.mrb[0].mxu0
        %1728 = vmatprep.mubr.f32.mxu0 %v1392
        %1729 = vmatmul.mubr.f32.gmra.mrb[0].mxu0 %v1061
        %v1730 = vpop.f32.mrb[0].mxu0
        %v1731 = vadd.f32 0.0, %v1730
        %v1732 = vpop.f32.mrb[0].mxu0
        %1733 = vmatprep.mubr.f32.mxu0 %v1395
        %1734 = vmatmul.mubr.f32.gmra.mrb[0].mxu0 %v1063
        %v1735 = vpop.f32.mrb[0].mxu0
        %v1736 = vadd.f32 0.0, %v1735
        %v1737 = vpop.f32.mrb[0].mxu0
        %1738 = vmatprep.mubr.f32.mxu0 %v1398
        %1739 = vmatmul.mubr.f32.gmra.mrb[0].mxu0 %v1065
        %v1740 = vpop.f32.mrb[0].mxu0
        %v1741 = vadd.f32 0.0, %v1740
        %v1742 = vpop.f32.mrb[0].mxu0
        %1743 = vmatprep.mubr.f32.mxu0 %v1401
        %1744 = vmatmul.mubr.f32.gmra.mrb[0].mxu0 %v1067
        %v1745 = vpop.f32.mrb[0].mxu0
        %v1746 = vadd.f32 0.0, %v1745
        %v1747 = vpop.f32.mrb[0].mxu0
        %1748 = vmatprep.mubr.f32.mxu0 %v1404
        %1749 = vmatmul.mubr.f32.gmra.mrb[0].mxu0 %v1069
        %v1750 = vpop.f32.mrb[0].mxu0
        %v1751 = vadd.f32 0.0, %v1750
        %v1752 = vpop.f32.mrb[0].mxu0
        %1753 = vmatprep.mubr.f32.mxu0 %v1407
        %1754 = vmatmul.mubr.f32.gmra.mrb[0].mxu0 %v1071
        %v1755 = vpop.f32.mrb[0].mxu0
        %v1756 = vadd.f32 0.0, %v1755
        %v1757 = vpop.f32.mrb[0].mxu0
        %1758 = vmatprep.mubr.f32.mxu0 %v1410
        %1759 = vmatmul.mubr.f32.gmra.mrb[0].mxu0 %v1073
        %v1760 = vpop.f32.mrb[0].mxu0
        %v1761 = vadd.f32 0.0, %v1760
        %v1762 = vpop.f32.mrb[0].mxu0
        %1763 = vmatprep.mubr.f32.mxu0 %v1413
        %1764 = vmatmul.mubr.f32.gmra.mrb[0].mxu0 %v1075
        %v1765 = vpop.f32.mrb[0].mxu0
        %v1766 = vadd.f32 0.0, %v1765
        %v1767 = vpop.f32.mrb[0].mxu0
        %1768 = vmatprep.mubr.f32.mxu0 %v1416
        %1769 = vmatmul.mubr.f32.gmra.mrb[0].mxu0 %v1077
        %v1770 = vpop.f32.mrb[0].mxu0
        %v1771 = vadd.f32 0.0, %v1770
        %v1772 = vpop.f32.mrb[0].mxu0
        %1773 = vmatprep.mubr.f32.mxu0 %v1419
        %1774 = vmatmul.mubr.f32.gmra.mrb[0].mxu0 %v1079
        %v1775 = vpop.f32.mrb[0].mxu0
        %v1776 = vadd.f32 0.0, %v1775
        %v1777 = vpop.f32.mrb[0].mxu0
        %1778 = vmatprep.mubr.f32.mxu0 %v1422
        %1779 = vmatmul.mubr.f32.gmra.mrb[0].mxu0 %v1081
        %v1780 = vpop.f32.mrb[0].mxu0
        %v1781 = vadd.f32 0.0, %v1780
        %v1782 = vpop.f32.mrb[0].mxu0
        %1783 = vmatprep.mubr.f32.mxu0 %v1425
        %1784 = vmatmul.mubr.f32.gmra.mrb[0].mxu0 %v1083
        %v1785 = vpop.f32.mrb[0].mxu0
        %v1786 = vadd.f32 0.0, %v1785
        %v1787 = vpop.f32.mrb[0].mxu0
        %1788 = vmatprep.mubr.f32.mxu0 %v1428
        %1789 = vmatmul.mubr.f32.gmra.mrb[0].mxu0 %v1085
        %v1790 = vpop.f32.mrb[0].mxu0
        %v1791 = vadd.f32 0.0, %v1790
        %v1792 = vpop.f32.mrb[0].mxu0
        %1793 = vmatprep.mubr.f32.mxu0 %v1431
        %1794 = vmatmul.mubr.f32.gmra.mrb[0].mxu0 %v1087
        %v1795 = vpop.f32.mrb[0].mxu0
        %v1796 = vadd.f32 0.0, %v1795
        %v1797 = vpop.f32.mrb[0].mxu0
        %1798 = vmatprep.mubr.f32.mxu0 %v1434
        %1799 = vmatmul.mubr.f32.gmra.mrb[0].mxu0 %v1089
        %v1800 = vpop.f32.mrb[0].mxu0
        %v1801 = vadd.f32 0.0, %v1800
        %v1802 = vpop.f32.mrb[0].mxu0
        %1803 = vmatprep.mubr.f32.mxu0 %v1437
        %1804 = vmatmul.mubr.f32.gmra.mrb[0].mxu0 %v1091
        %v1805 = vpop.f32.mrb[0].mxu0
        %v1806 = vadd.f32 0.0, %v1805
        %v1807 = vpop.f32.mrb[0].mxu0
        %1808 = vmatprep.mubr.f32.mxu0 %v1440
        %1809 = vmatmul.mubr.f32.gmra.mrb[0].mxu0 %v1093
        %v1810 = vpop.f32.mrb[0].mxu0
        %v1811 = vadd.f32 0.0, %v1810
        %v1812 = vpop.f32.mrb[0].mxu0
        %1813 = vmatprep.mubr.f32.mxu0 %v1443
        %1814 = vmatmul.mubr.f32.gmra.mrb[0].mxu0 %v1095
        %v1815 = vpop.f32.mrb[0].mxu0
        %v1816 = vadd.f32 0.0, %v1815
        %v1817 = vpop.f32.mrb[0].mxu0
        %1818 = vmatprep.mubr.f32.mxu0 %v1446
        %1819 = vmatmul.mubr.f32.gmra.mrb[0].mxu0 %v1097
        %v1820 = vpop.f32.mrb[0].mxu0
        %v1821 = vadd.f32 0.0, %v1820
        %v1822 = vpop.f32.mrb[0].mxu0
        %1823 = vmatprep.mubr.f32.mxu0 %v1449
        %1824 = vmatmul.mubr.f32.gmra.mrb[0].mxu0 %v1099
        %v1825 = vpop.f32.mrb[0].mxu0
        %v1826 = vadd.f32 0.0, %v1825
        %v1827 = vpop.f32.mrb[0].mxu0
        %1828 = vmatprep.mubr.f32.mxu0 %v1452
        %1829 = vmatmul.mubr.f32.gmra.mrb[0].mxu0 %v1101
        %v1830 = vpop.f32.mrb[0].mxu0
        %v1831 = vadd.f32 0.0, %v1830
        %v1832 = vpop.f32.mrb[0].mxu0
        %1833 = vmatprep.mubr.f32.mxu0 %v1455
        %1834 = vmatmul.mubr.f32.gmra.mrb[0].mxu0 %v1103
        %v1835 = vpop.f32.mrb[0].mxu0
        %v1836 = vadd.f32 0.0, %v1835
        %v1837 = vpop.f32.mrb[0].mxu0
        %1838 = vmatprep.mubr.f32.mxu0 %v1458
        %1839 = vmatmul.mubr.f32.gmra.mrb[0].mxu0 %v1105
        %v1840 = vpop.f32.mrb[0].mxu0
        %v1841 = vadd.f32 0.0, %v1840
        %v1842 = vpop.f32.mrb[0].mxu0
        %1843 = vmatprep.mubr.f32.mxu0 %v1461
        %1844 = vmatmul.mubr.f32.gmra.mrb[0].mxu0 %v1107
        %v1845 = vpop.f32.mrb[0].mxu0
        %v1846 = vadd.f32 0.0, %v1845
        %v1847 = vpop.f32.mrb[0].mxu0
        %1848 = vmatprep.mubr.f32.mxu0 %v1464
        %1849 = vmatmul.mubr.f32.gmra.mrb[0].mxu0 %v1109
        %v1850 = vpop.f32.mrb[0].mxu0
        %v1851 = vadd.f32 0.0, %v1850
        %v1852 = vpop.f32.mrb[0].mxu0
        %1853 = vmatprep.mubr.f32.mxu0 %v1467
        %1854 = vmatmul.mubr.f32.gmra.mrb[0].mxu0 %v1111
        %v1855 = vpop.f32.mrb[0].mxu0
        %v1856 = vadd.f32 0.0, %v1855
        %v1857 = vpop.f32.mrb[0].mxu0
        %1858 = vdwg.mxu0
        %v1859 = vld [vmem:[%s150] sm:$0xff]
        %v1860 = vld [vmem:[%s150 + $0x8] sm:$0xff]
        %v1861 = vld [vmem:[%s150 + $0x10] sm:$0xff]
        %v1862 = vld [vmem:[%s150 + $0x18] sm:$0xff]
        %v1863 = vld [vmem:[%s150 + $0x20] sm:$0xff]
        %v1864 = vld [vmem:[%s150 + $0x28] sm:$0xff]
        %v1865 = vld [vmem:[%s150 + $0x30] sm:$0xff]
        %v1866 = vld [vmem:[%s150 + $0x38] sm:$0xff]
        %v1867 = vld [vmem:[%s150 + $0x40] sm:$0xff]
        %v1868 = vld [vmem:[%s150 + $0x48] sm:$0xff]
        %v1869 = vld [vmem:[%s150 + $0x50] sm:$0xff]
        %v1870 = vld [vmem:[%s150 + $0x58] sm:$0xff]
        %v1871 = vld [vmem:[%s150 + $0x60] sm:$0xff]
        %v1872 = vld [vmem:[%s150 + $0x68] sm:$0xff]
        %v1873 = vld [vmem:[%s150 + $0x70] sm:$0xff]
        %v1874 = vld [vmem:[%s150 + $0x78] sm:$0xff]
        %v1875 = vld [vmem:[%s150 + $0x80] sm:$0xff]
        %v1876 = vld [vmem:[%s150 + $0x88] sm:$0xff]
        %v1877 = vld [vmem:[%s150 + $0x90] sm:$0xff]
        %v1878 = vld [vmem:[%s150 + $0x98] sm:$0xff]
        %v1879 = vld [vmem:[%s150 + $0xa0] sm:$0xff]
        %v1880 = vld [vmem:[%s150 + $0xa8] sm:$0xff]
        %v1881 = vld [vmem:[%s150 + $0xb0] sm:$0xff]
        %v1882 = vld [vmem:[%s150 + $0xb8] sm:$0xff]
        %v1883 = vld [vmem:[%s150 + $0xc0] sm:$0xff]
        %v1884 = vld [vmem:[%s150 + $0xc8] sm:$0xff]
        %v1885 = vld [vmem:[%s150 + $0xd0] sm:$0xff]
        %v1886 = vld [vmem:[%s150 + $0xd8] sm:$0xff]
        %v1887 = vld [vmem:[%s150 + $0xe0] sm:$0xff]
        %v1888 = vld [vmem:[%s150 + $0xe8] sm:$0xff]
        %v1889 = vld [vmem:[%s150 + $0xf0] sm:$0xff]
        %v1890 = vld [vmem:[%s150 + $0xf8] sm:$0xff]
        %v1891 = vld [vmem:[%s150 + $0x100] sm:$0xff]
        %v1892 = vld [vmem:[%s150 + $0x108] sm:$0xff]
        %v1893 = vld [vmem:[%s150 + $0x110] sm:$0xff]
        %v1894 = vld [vmem:[%s150 + $0x118] sm:$0xff]
        %v1895 = vld [vmem:[%s150 + $0x120] sm:$0xff]
        %v1896 = vld [vmem:[%s150 + $0x128] sm:$0xff]
        %v1897 = vld [vmem:[%s150 + $0x130] sm:$0xff]
        %v1898 = vld [vmem:[%s150 + $0x138] sm:$0xff]
        %v1899 = vld [vmem:[%s150 + $0x140] sm:$0xff]
        %v1900 = vld [vmem:[%s150 + $0x148] sm:$0xff]
        %v1901 = vld [vmem:[%s150 + $0x150] sm:$0xff]
        %v1902 = vld [vmem:[%s150 + $0x158] sm:$0xff]
        %v1903 = vld [vmem:[%s150 + $0x160] sm:$0xff]
        %v1904 = vld [vmem:[%s150 + $0x168] sm:$0xff]
        %v1905 = vld [vmem:[%s150 + $0x170] sm:$0xff]
        %v1906 = vld [vmem:[%s150 + $0x178] sm:$0xff]
        %v1907 = vld [vmem:[%s150 + $0x180] sm:$0xff]
        %v1908 = vld [vmem:[%s150 + $0x188] sm:$0xff]
        %v1909 = vld [vmem:[%s150 + $0x190] sm:$0xff]
        %v1910 = vld [vmem:[%s150 + $0x198] sm:$0xff]
        %v1911 = vld [vmem:[%s150 + $0x1a0] sm:$0xff]
        %v1912 = vld [vmem:[%s150 + $0x1a8] sm:$0xff]
        %v1913 = vld [vmem:[%s150 + $0x1b0] sm:$0xff]
        %v1914 = vld [vmem:[%s150 + $0x1b8] sm:$0xff]
        %v1915 = vld [vmem:[%s150 + $0x1c0] sm:$0xff]
        %v1916 = vld [vmem:[%s150 + $0x1c8] sm:$0xff]
        %v1917 = vld [vmem:[%s150 + $0x1d0] sm:$0xff]
        %v1918 = vld [vmem:[%s150 + $0x1d8] sm:$0xff]
        %v1919 = vld [vmem:[%s150 + $0x1e0] sm:$0xff]
        %v1920 = vld [vmem:[%s150 + $0x1e8] sm:$0xff]
        %v1921 = vld [vmem:[%s150 + $0x1f0] sm:$0xff]
        %v1922 = vld [vmem:[%s150 + $0x1f8] sm:$0xff]
        %v1923 = vld [vmem:[%s150 + $0x200] sm:$0xff]
        %v1924 = vadd.f32 %v1859, %v1536
        %v1925 = vadd.f32 %v1860, %v1541
        %v1926 = vadd.f32 %v1861, %v1546
        %v1927 = vadd.f32 %v1862, %v1551
        %v1928 = vadd.f32 %v1863, %v1556
        %v1929 = vadd.f32 %v1864, %v1561
        %v1930 = vadd.f32 %v1865, %v1566
        %v1931 = vadd.f32 %v1866, %v1571
        %v1932 = vadd.f32 %v1867, %v1576
        %v1933 = vadd.f32 %v1868, %v1581
        %v1934 = vadd.f32 %v1869, %v1586
        %v1935 = vadd.f32 %v1870, %v1591
        %v1936 = vadd.f32 %v1871, %v1596
        %v1937 = vadd.f32 %v1872, %v1601
        %v1938 = vadd.f32 %v1873, %v1606
        %v1939 = vadd.f32 %v1874, %v1611
        %v1940 = vadd.f32 %v1875, %v1616
        %v1941 = vadd.f32 %v1876, %v1621
        %v1942 = vadd.f32 %v1877, %v1626
        %v1943 = vadd.f32 %v1878, %v1631
        %v1944 = vadd.f32 %v1879, %v1636
        %v1945 = vadd.f32 %v1880, %v1641
        %v1946 = vadd.f32 %v1881, %v1646
        %v1947 = vadd.f32 %v1882, %v1651
        %v1948 = vadd.f32 %v1883, %v1656
        %v1949 = vadd.f32 %v1884, %v1661
        %v1950 = vadd.f32 %v1885, %v1666
        %v1951 = vadd.f32 %v1886, %v1671
        %v1952 = vadd.f32 %v1887, %v1676
        %v1953 = vadd.f32 %v1888, %v1681
        %v1954 = vadd.f32 %v1889, %v1686
        %v1955 = vadd.f32 %v1890, %v1691
        %v1956 = vadd.f32 %v1891, %v1696
        %v1957 = vadd.f32 %v1892, %v1701
        %v1958 = vadd.f32 %v1893, %v1706
        %v1959 = vadd.f32 %v1894, %v1711
        %v1960 = vadd.f32 %v1895, %v1716
        %v1961 = vadd.f32 %v1896, %v1721
        %v1962 = vadd.f32 %v1897, %v1726
        %v1963 = vadd.f32 %v1898, %v1731
        %v1964 = vadd.f32 %v1899, %v1736
        %v1965 = vadd.f32 %v1900, %v1741
        %v1966 = vadd.f32 %v1901, %v1746
        %v1967 = vadd.f32 %v1902, %v1751
        %v1968 = vadd.f32 %v1903, %v1756
        %v1969 = vadd.f32 %v1904, %v1761
        %v1970 = vadd.f32 %v1905, %v1766
        %v1971 = vadd.f32 %v1906, %v1771
        %v1972 = vadd.f32 %v1907, %v1776
        %v1973 = vadd.f32 %v1908, %v1781
        %v1974 = vadd.f32 %v1909, %v1786
        %v1975 = vadd.f32 %v1910, %v1791
        %v1976 = vadd.f32 %v1911, %v1796
        %v1977 = vadd.f32 %v1912, %v1801
        %v1978 = vadd.f32 %v1913, %v1806
        %v1979 = vadd.f32 %v1914, %v1811
        %v1980 = vadd.f32 %v1915, %v1816
        %v1981 = vadd.f32 %v1916, %v1821
        %v1982 = vadd.f32 %v1917, %v1826
        %v1983 = vadd.f32 %v1918, %v1831
        %v1984 = vadd.f32 %v1919, %v1836
        %v1985 = vadd.f32 %v1920, %v1841
        %v1986 = vadd.f32 %v1921, %v1846
        %v1987 = vadd.f32 %v1922, %v1851
        %v1988 = vadd.f32 %v1923, %v1856
        %1989 = vst [vmem:[%s150] sm:$0xff] %v1924
        %1990 = vst [vmem:[%s150 + $0x8] sm:$0xff] %v1925
        %1991 = vst [vmem:[%s150 + $0x10] sm:$0xff] %v1926
        %1992 = vst [vmem:[%s150 + $0x18] sm:$0xff] %v1927
        %1993 = vst [vmem:[%s150 + $0x20] sm:$0xff] %v1928
        %1994 = vst [vmem:[%s150 + $0x28] sm:$0xff] %v1929
        %1995 = vst [vmem:[%s150 + $0x30] sm:$0xff] %v1930
        %1996 = vst [vmem:[%s150 + $0x38] sm:$0xff] %v1931
        %1997 = vst [vmem:[%s150 + $0x40] sm:$0xff] %v1932
        %1998 = vst [vmem:[%s150 + $0x48] sm:$0xff] %v1933
        %1999 = vst [vmem:[%s150 + $0x50] sm:$0xff] %v1934
        %2000 = vst [vmem:[%s150 + $0x58] sm:$0xff] %v1935
        %2001 = vst [vmem:[%s150 + $0x60] sm:$0xff] %v1936
        %2002 = vst [vmem:[%s150 + $0x68] sm:$0xff] %v1937
        %2003 = vst [vmem:[%s150 + $0x70] sm:$0xff] %v1938
        %2004 = vst [vmem:[%s150 + $0x78] sm:$0xff] %v1939
        %2005 = vst [vmem:[%s150 + $0x80] sm:$0xff] %v1940
        %2006 = vst [vmem:[%s150 + $0x88] sm:$0xff] %v1941
        %2007 = vst [vmem:[%s150 + $0x90] sm:$0xff] %v1942
        %2008 = vst [vmem:[%s150 + $0x98] sm:$0xff] %v1943
        %2009 = vst [vmem:[%s150 + $0xa0] sm:$0xff] %v1944
        %2010 = vst [vmem:[%s150 + $0xa8] sm:$0xff] %v1945
        %2011 = vst [vmem:[%s150 + $0xb0] sm:$0xff] %v1946
        %2012 = vst [vmem:[%s150 + $0xb8] sm:$0xff] %v1947
        %2013 = vst [vmem:[%s150 + $0xc0] sm:$0xff] %v1948
        %2014 = vst [vmem:[%s150 + $0xc8] sm:$0xff] %v1949
        %2015 = vst [vmem:[%s150 + $0xd0] sm:$0xff] %v1950
        %2016 = vst [vmem:[%s150 + $0xd8] sm:$0xff] %v1951
        %2017 = vst [vmem:[%s150 + $0xe0] sm:$0xff] %v1952
        %2018 = vst [vmem:[%s150 + $0xe8] sm:$0xff] %v1953
        %2019 = vst [vmem:[%s150 + $0xf0] sm:$0xff] %v1954
        %2020 = vst [vmem:[%s150 + $0xf8] sm:$0xff] %v1955
        %2021 = vst [vmem:[%s150 + $0x100] sm:$0xff] %v1956
        %2022 = vst [vmem:[%s150 + $0x108] sm:$0xff] %v1957
        %2023 = vst [vmem:[%s150 + $0x110] sm:$0xff] %v1958
        %2024 = vst [vmem:[%s150 + $0x118] sm:$0xff] %v1959
        %2025 = vst [vmem:[%s150 + $0x120] sm:$0xff] %v1960
        %2026 = vst [vmem:[%s150 + $0x128] sm:$0xff] %v1961
        %2027 = vst [vmem:[%s150 + $0x130] sm:$0xff] %v1962
        %2028 = vst [vmem:[%s150 + $0x138] sm:$0xff] %v1963
        %2029 = vst [vmem:[%s150 + $0x140] sm:$0xff] %v1964
        %2030 = vst [vmem:[%s150 + $0x148] sm:$0xff] %v1965
        %2031 = vst [vmem:[%s150 + $0x150] sm:$0xff] %v1966
        %2032 = vst [vmem:[%s150 + $0x158] sm:$0xff] %v1967
        %2033 = vst [vmem:[%s150 + $0x160] sm:$0xff] %v1968
        %2034 = vst [vmem:[%s150 + $0x168] sm:$0xff] %v1969
        %2035 = vst [vmem:[%s150 + $0x170] sm:$0xff] %v1970
        %2036 = vst [vmem:[%s150 + $0x178] sm:$0xff] %v1971
        %2037 = vst [vmem:[%s150 + $0x180] sm:$0xff] %v1972
        %2038 = vst [vmem:[%s150 + $0x188] sm:$0xff] %v1973
        %2039 = vst [vmem:[%s150 + $0x190] sm:$0xff] %v1974
        %2040 = vst [vmem:[%s150 + $0x198] sm:$0xff] %v1975
        %2041 = vst [vmem:[%s150 + $0x1a0] sm:$0xff] %v1976
        %2042 = vst [vmem:[%s150 + $0x1a8] sm:$0xff] %v1977
        %2043 = vst [vmem:[%s150 + $0x1b0] sm:$0xff] %v1978
        %2044 = vst [vmem:[%s150 + $0x1b8] sm:$0xff] %v1979
        %2045 = vst [vmem:[%s150 + $0x1c0] sm:$0xff] %v1980
        %2046 = vst [vmem:[%s150 + $0x1c8] sm:$0xff] %v1981
        %2047 = vst [vmem:[%s150 + $0x1d0] sm:$0xff] %v1982
        %2048 = vst [vmem:[%s150 + $0x1d8] sm:$0xff] %v1983
        %2049 = vst [vmem:[%s150 + $0x1e0] sm:$0xff] %v1984
        %2050 = vst [vmem:[%s150 + $0x1e8] sm:$0xff] %v1985
        %2051 = vst [vmem:[%s150 + $0x1f0] sm:$0xff] %v1986
        %2052 = vst [vmem:[%s150 + $0x1f8] sm:$0xff] %v1987
        %2053 = vst [vmem:[%s150 + $0x200] sm:$0xff] %v1988
        %s2054 = scalar_lea.vmem %s0, 2080
        %v2055 = vld [vmem:[%s2054] sm:$0xff]
        %v2056 = vld [vmem:[%s2054 + $0x8] sm:$0xff]
        %v2057 = vld [vmem:[%s2054 + $0x10] sm:$0xff]
        %v2058 = vld [vmem:[%s2054 + $0x18] sm:$0xff]
        %v2059 = vld [vmem:[%s2054 + $0x20] sm:$0xff]
        %v2060 = vld [vmem:[%s2054 + $0x28] sm:$0xff]
        %v2061 = vld [vmem:[%s2054 + $0x30] sm:$0xff]
        %v2062 = vld [vmem:[%s2054 + $0x38] sm:$0xff]
        %v2063 = vld [vmem:[%s2054 + $0x40] sm:$0xff]
        %v2064 = vld [vmem:[%s2054 + $0x48] sm:$0xff]
        %v2065 = vld [vmem:[%s2054 + $0x50] sm:$0xff]
        %v2066 = vld [vmem:[%s2054 + $0x58] sm:$0xff]
        %v2067 = vld [vmem:[%s2054 + $0x60] sm:$0xff]
        %v2068 = vld [vmem:[%s2054 + $0x68] sm:$0xff]
        %v2069 = vld [vmem:[%s2054 + $0x70] sm:$0xff]
        %v2070 = vld [vmem:[%s2054 + $0x78] sm:$0xff]
        %v2071 = vld [vmem:[%s2054 + $0x80] sm:$0xff]
        %v2072 = vld [vmem:[%s2054 + $0x88] sm:$0xff]
        %v2073 = vld [vmem:[%s2054 + $0x90] sm:$0xff]
        %v2074 = vld [vmem:[%s2054 + $0x98] sm:$0xff]
        %v2075 = vld [vmem:[%s2054 + $0xa0] sm:$0xff]
        %v2076 = vld [vmem:[%s2054 + $0xa8] sm:$0xff]
        %v2077 = vld [vmem:[%s2054 + $0xb0] sm:$0xff]
        %v2078 = vld [vmem:[%s2054 + $0xb8] sm:$0xff]
        %v2079 = vld [vmem:[%s2054 + $0xc0] sm:$0xff]
        %v2080 = vld [vmem:[%s2054 + $0xc8] sm:$0xff]
        %v2081 = vld [vmem:[%s2054 + $0xd0] sm:$0xff]
        %v2082 = vld [vmem:[%s2054 + $0xd8] sm:$0xff]
        %v2083 = vld [vmem:[%s2054 + $0xe0] sm:$0xff]
        %v2084 = vld [vmem:[%s2054 + $0xe8] sm:$0xff]
        %v2085 = vld [vmem:[%s2054 + $0xf0] sm:$0xff]
        %v2086 = vld [vmem:[%s2054 + $0xf8] sm:$0xff]
        %v2087 = vld [vmem:[%s2054 + $0x100] sm:$0xff]
        %v2088 = vld [vmem:[%s2054 + $0x108] sm:$0xff]
        %v2089 = vld [vmem:[%s2054 + $0x110] sm:$0xff]
        %v2090 = vld [vmem:[%s2054 + $0x118] sm:$0xff]
        %v2091 = vld [vmem:[%s2054 + $0x120] sm:$0xff]
        %v2092 = vld [vmem:[%s2054 + $0x128] sm:$0xff]
        %v2093 = vld [vmem:[%s2054 + $0x130] sm:$0xff]
        %v2094 = vld [vmem:[%s2054 + $0x138] sm:$0xff]
        %v2095 = vld [vmem:[%s2054 + $0x140] sm:$0xff]
        %v2096 = vld [vmem:[%s2054 + $0x148] sm:$0xff]
        %v2097 = vld [vmem:[%s2054 + $0x150] sm:$0xff]
        %v2098 = vld [vmem:[%s2054 + $0x158] sm:$0xff]
        %v2099 = vld [vmem:[%s2054 + $0x160] sm:$0xff]
        %v2100 = vld [vmem:[%s2054 + $0x168] sm:$0xff]
        %v2101 = vld [vmem:[%s2054 + $0x170] sm:$0xff]
        %v2102 = vld [vmem:[%s2054 + $0x178] sm:$0xff]
        %v2103 = vld [vmem:[%s2054 + $0x180] sm:$0xff]
        %v2104 = vld [vmem:[%s2054 + $0x188] sm:$0xff]
        %v2105 = vld [vmem:[%s2054 + $0x190] sm:$0xff]
        %v2106 = vld [vmem:[%s2054 + $0x198] sm:$0xff]
        %v2107 = vld [vmem:[%s2054 + $0x1a0] sm:$0xff]
        %v2108 = vld [vmem:[%s2054 + $0x1a8] sm:$0xff]
        %v2109 = vld [vmem:[%s2054 + $0x1b0] sm:$0xff]
        %v2110 = vld [vmem:[%s2054 + $0x1b8] sm:$0xff]
        %v2111 = vld [vmem:[%s2054 + $0x1c0] sm:$0xff]
        %v2112 = vld [vmem:[%s2054 + $0x1c8] sm:$0xff]
        %v2113 = vld [vmem:[%s2054 + $0x1d0] sm:$0xff]
        %v2114 = vld [vmem:[%s2054 + $0x1d8] sm:$0xff]
        %v2115 = vld [vmem:[%s2054 + $0x1e0] sm:$0xff]
        %v2116 = vld [vmem:[%s2054 + $0x1e8] sm:$0xff]
        %v2117 = vld [vmem:[%s2054 + $0x1f0] sm:$0xff]
        %v2118 = vld [vmem:[%s2054 + $0x1f8] sm:$0xff]
        %v2119 = vld [vmem:[%s2054 + $0x200] sm:$0xff]
        %v2120 = vld [vmem:[%s2054 + $0x208] sm:$0xff]
        %v2121 = vld [vmem:[%s2054 + $0x210] sm:$0xff]
        %v2122 = vld [vmem:[%s2054 + $0x218] sm:$0xff]
        %v2123 = vld [vmem:[%s2054 + $0x220] sm:$0xff]
        %v2124 = vld [vmem:[%s2054 + $0x228] sm:$0xff]
        %v2125 = vld [vmem:[%s2054 + $0x230] sm:$0xff]
        %v2126 = vld [vmem:[%s2054 + $0x238] sm:$0xff]
        %v2127 = vld [vmem:[%s2054 + $0x240] sm:$0xff]
        %v2128 = vld [vmem:[%s2054 + $0x248] sm:$0xff]
        %v2129 = vld [vmem:[%s2054 + $0x250] sm:$0xff]
        %v2130 = vld [vmem:[%s2054 + $0x258] sm:$0xff]
        %v2131 = vld [vmem:[%s2054 + $0x260] sm:$0xff]
        %v2132 = vld [vmem:[%s2054 + $0x268] sm:$0xff]
        %v2133 = vld [vmem:[%s2054 + $0x270] sm:$0xff]
        %v2134 = vld [vmem:[%s2054 + $0x278] sm:$0xff]
        %v2135 = vld [vmem:[%s2054 + $0x280] sm:$0xff]
        %v2136 = vld [vmem:[%s2054 + $0x288] sm:$0xff]
        %v2137 = vld [vmem:[%s2054 + $0x290] sm:$0xff]
        %v2138 = vld [vmem:[%s2054 + $0x298] sm:$0xff]
        %v2139 = vld [vmem:[%s2054 + $0x2a0] sm:$0xff]
        %v2140 = vld [vmem:[%s2054 + $0x2a8] sm:$0xff]
        %v2141 = vld [vmem:[%s2054 + $0x2b0] sm:$0xff]
        %v2142 = vld [vmem:[%s2054 + $0x2b8] sm:$0xff]
        %v2143 = vld [vmem:[%s2054 + $0x2c0] sm:$0xff]
        %v2144 = vld [vmem:[%s2054 + $0x2c8] sm:$0xff]
        %v2145 = vld [vmem:[%s2054 + $0x2d0] sm:$0xff]
        %v2146 = vld [vmem:[%s2054 + $0x2d8] sm:$0xff]
        %v2147 = vld [vmem:[%s2054 + $0x2e0] sm:$0xff]
        %v2148 = vld [vmem:[%s2054 + $0x2e8] sm:$0xff]
        %v2149 = vld [vmem:[%s2054 + $0x2f0] sm:$0xff]
        %v2150 = vld [vmem:[%s2054 + $0x2f8] sm:$0xff]
        %v2151 = vld [vmem:[%s2054 + $0x300] sm:$0xff]
        %v2152 = vld [vmem:[%s2054 + $0x308] sm:$0xff]
        %v2153 = vld [vmem:[%s2054 + $0x310] sm:$0xff]
        %v2154 = vld [vmem:[%s2054 + $0x318] sm:$0xff]
        %v2155 = vld [vmem:[%s2054 + $0x320] sm:$0xff]
        %v2156 = vld [vmem:[%s2054 + $0x328] sm:$0xff]
        %v2157 = vld [vmem:[%s2054 + $0x330] sm:$0xff]
        %v2158 = vld [vmem:[%s2054 + $0x338] sm:$0xff]
        %v2159 = vld [vmem:[%s2054 + $0x340] sm:$0xff]
        %v2160 = vld [vmem:[%s2054 + $0x348] sm:$0xff]
        %v2161 = vld [vmem:[%s2054 + $0x350] sm:$0xff]
        %v2162 = vld [vmem:[%s2054 + $0x358] sm:$0xff]
        %v2163 = vld [vmem:[%s2054 + $0x360] sm:$0xff]
        %v2164 = vld [vmem:[%s2054 + $0x368] sm:$0xff]
        %v2165 = vld [vmem:[%s2054 + $0x370] sm:$0xff]
        %v2166 = vld [vmem:[%s2054 + $0x378] sm:$0xff]
        %v2167 = vld [vmem:[%s2054 + $0x380] sm:$0xff]
        %v2168 = vld [vmem:[%s2054 + $0x388] sm:$0xff]
        %v2169 = vld [vmem:[%s2054 + $0x390] sm:$0xff]
        %v2170 = vld [vmem:[%s2054 + $0x398] sm:$0xff]
        %v2171 = vld [vmem:[%s2054 + $0x3a0] sm:$0xff]
        %v2172 = vld [vmem:[%s2054 + $0x3a8] sm:$0xff]
        %v2173 = vld [vmem:[%s2054 + $0x3b0] sm:$0xff]
        %v2174 = vld [vmem:[%s2054 + $0x3b8] sm:$0xff]
        %v2175 = vld [vmem:[%s2054 + $0x3c0] sm:$0xff]
        %v2176 = vld [vmem:[%s2054 + $0x3c8] sm:$0xff]
        %v2177 = vld [vmem:[%s2054 + $0x3d0] sm:$0xff]
        %v2178 = vld [vmem:[%s2054 + $0x3d8] sm:$0xff]
        %v2179 = vld [vmem:[%s2054 + $0x3e0] sm:$0xff]
        %v2180 = vld [vmem:[%s2054 + $0x3e8] sm:$0xff]
        %v2181 = vld [vmem:[%s2054 + $0x3f0] sm:$0xff]
        %v2182 = vld [vmem:[%s2054 + $0x3f8] sm:$0xff]
        %v2183 = vld [vmem:[%s2054 + $0x400] sm:$0xff]
        %v2184 = vld [vmem:[%s2054 + $0x408] sm:$0xff]
        %2185 = vrot.lane.b32.xlu0 %v161, 126
        %v2186 = vpop.permute.xlu0 %2185
        %2187 = vrot.lane.b32.xlu0 %v162, 126
        %v2188 = vpop.permute.xlu0 %2187
        %2189 = vrot.lane.b32.xlu0 %v163, 126
        %v2190 = vpop.permute.xlu0 %2189
        %2191 = vrot.lane.b32.xlu0 %v164, 126
        %v2192 = vpop.permute.xlu0 %2191
        %2193 = vrot.lane.b32.xlu0 %v165, 126
        %v2194 = vpop.permute.xlu0 %2193
        %2195 = vrot.lane.b32.xlu0 %v166, 126
        %v2196 = vpop.permute.xlu0 %2195
        %2197 = vrot.lane.b32.xlu0 %v167, 126
        %v2198 = vpop.permute.xlu0 %2197
        %2199 = vrot.lane.b32.xlu0 %v168, 126
        %v2200 = vpop.permute.xlu0 %2199
        %2201 = vrot.lane.b32.xlu0 %v169, 126
        %v2202 = vpop.permute.xlu0 %2201
        %2203 = vrot.lane.b32.xlu0 %v170, 126
        %v2204 = vpop.permute.xlu0 %2203
        %2205 = vrot.lane.b32.xlu0 %v171, 126
        %v2206 = vpop.permute.xlu0 %2205
        %2207 = vrot.lane.b32.xlu0 %v172, 126
        %v2208 = vpop.permute.xlu0 %2207
        %2209 = vrot.lane.b32.xlu0 %v173, 126
        %v2210 = vpop.permute.xlu0 %2209
        %2211 = vrot.lane.b32.xlu0 %v174, 126
        %v2212 = vpop.permute.xlu0 %2211
        %2213 = vrot.lane.b32.xlu0 %v175, 126
        %v2214 = vpop.permute.xlu0 %2213
        %2215 = vrot.lane.b32.xlu0 %v176, 126
        %v2216 = vpop.permute.xlu0 %2215
        %2217 = vrot.lane.b32.xlu0 %v177, 126
        %v2218 = vpop.permute.xlu0 %2217
        %2219 = vrot.lane.b32.xlu0 %v178, 126
        %v2220 = vpop.permute.xlu0 %2219
        %2221 = vrot.lane.b32.xlu0 %v179, 126
        %v2222 = vpop.permute.xlu0 %2221
        %2223 = vrot.lane.b32.xlu0 %v180, 126
        %v2224 = vpop.permute.xlu0 %2223
        %2225 = vrot.lane.b32.xlu0 %v181, 126
        %v2226 = vpop.permute.xlu0 %2225
        %2227 = vrot.lane.b32.xlu0 %v182, 126
        %v2228 = vpop.permute.xlu0 %2227
        %2229 = vrot.lane.b32.xlu0 %v183, 126
        %v2230 = vpop.permute.xlu0 %2229
        %2231 = vrot.lane.b32.xlu0 %v184, 126
        %v2232 = vpop.permute.xlu0 %2231
        %2233 = vrot.lane.b32.xlu0 %v185, 126
        %v2234 = vpop.permute.xlu0 %2233
        %2235 = vrot.lane.b32.xlu0 %v186, 126
        %v2236 = vpop.permute.xlu0 %2235
        %2237 = vrot.lane.b32.xlu0 %v187, 126
        %v2238 = vpop.permute.xlu0 %2237
        %2239 = vrot.lane.b32.xlu0 %v188, 126
        %v2240 = vpop.permute.xlu0 %2239
        %2241 = vrot.lane.b32.xlu0 %v189, 126
        %v2242 = vpop.permute.xlu0 %2241
        %2243 = vrot.lane.b32.xlu0 %v190, 126
        %v2244 = vpop.permute.xlu0 %2243
        %2245 = vrot.lane.b32.xlu0 %v191, 126
        %v2246 = vpop.permute.xlu0 %2245
        %2247 = vrot.lane.b32.xlu0 %v192, 126
        %v2248 = vpop.permute.xlu0 %2247
        %2249 = vrot.lane.b32.xlu0 %v193, 126
        %v2250 = vpop.permute.xlu0 %2249
        %2251 = vrot.lane.b32.xlu0 %v194, 126
        %v2252 = vpop.permute.xlu0 %2251
        %2253 = vrot.lane.b32.xlu0 %v195, 126
        %v2254 = vpop.permute.xlu0 %2253
        %2255 = vrot.lane.b32.xlu0 %v196, 126
        %v2256 = vpop.permute.xlu0 %2255
        %2257 = vrot.lane.b32.xlu0 %v197, 126
        %v2258 = vpop.permute.xlu0 %2257
        %2259 = vrot.lane.b32.xlu0 %v198, 126
        %v2260 = vpop.permute.xlu0 %2259
        %2261 = vrot.lane.b32.xlu0 %v199, 126
        %v2262 = vpop.permute.xlu0 %2261
        %2263 = vrot.lane.b32.xlu0 %v200, 126
        %v2264 = vpop.permute.xlu0 %2263
        %vm2265 = vcmask 1031168
        %v2266 = vsel %vm2265, %v2186, %v2188
        %v2267 = vsel %vm2265, %v2190, %v2192
        %v2268 = vsel %vm2265, %v2194, %v2196
        %v2269 = vsel %vm2265, %v2198, %v2200
        %v2270 = vsel %vm2265, %v2202, %v2204
        %v2271 = vsel %vm2265, %v2206, %v2208
        %v2272 = vsel %vm2265, %v2210, %v2212
        %v2273 = vsel %vm2265, %v2214, %v2216
        %v2274 = vsel %vm2265, %v2218, %v2220
        %v2275 = vsel %vm2265, %v2222, %v2224
        %v2276 = vsel %vm2265, %v2226, %v2228
        %v2277 = vsel %vm2265, %v2230, %v2232
        %v2278 = vsel %vm2265, %v2234, %v2236
        %v2279 = vsel %vm2265, %v2238, %v2240
        %v2280 = vsel %vm2265, %v2242, %v2244
        %v2281 = vsel %vm2265, %v2246, %v2248
        %v2282 = vsel %vm2265, %v2250, %v2252
        %v2283 = vsel %vm2265, %v2254, %v2256
        %v2284 = vsel %vm2265, %v2258, %v2260
        %v2285 = vsel %vm2265, %v2262, %v2264
        %v2307 = vsel %vm331, %v2056, 0
        %v2310 = vsel %vm331, %v2058, 0
        %v2313 = vsel %vm331, %v2060, 0
        %v2316 = vsel %vm331, %v2062, 0
        %v2319 = vsel %vm331, %v2064, 0
        %v2322 = vsel %vm331, %v2066, 0
        %v2325 = vsel %vm331, %v2068, 0
        %v2328 = vsel %vm331, %v2070, 0
        %v2331 = vsel %vm331, %v2072, 0
        %v2334 = vsel %vm331, %v2074, 0
        %v2337 = vsel %vm331, %v2076, 0
        %v2340 = vsel %vm331, %v2078, 0
        %v2343 = vsel %vm331, %v2080, 0
        %v2346 = vsel %vm331, %v2082, 0
        %v2349 = vsel %vm331, %v2084, 0
        %v2352 = vsel %vm331, %v2086, 0
        %v2355 = vsel %vm331, %v2088, 0
        %v2358 = vsel %vm331, %v2090, 0
        %v2361 = vsel %vm331, %v2092, 0
        %v2364 = vsel %vm331, %v2094, 0
        %v2367 = vsel %vm331, %v2096, 0
        %v2370 = vsel %vm331, %v2098, 0
        %v2373 = vsel %vm331, %v2100, 0
        %v2376 = vsel %vm331, %v2102, 0
        %v2379 = vsel %vm331, %v2104, 0
        %v2382 = vsel %vm331, %v2106, 0
        %v2385 = vsel %vm331, %v2108, 0
        %v2388 = vsel %vm331, %v2110, 0
        %v2391 = vsel %vm331, %v2112, 0
        %v2394 = vsel %vm331, %v2114, 0
        %v2397 = vsel %vm331, %v2116, 0
        %v2400 = vsel %vm331, %v2118, 0
        %v2403 = vsel %vm331, %v2120, 0
        %v2406 = vsel %vm331, %v2122, 0
        %v2409 = vsel %vm331, %v2124, 0
        %v2412 = vsel %vm331, %v2126, 0
        %v2415 = vsel %vm331, %v2128, 0
        %v2418 = vsel %vm331, %v2130, 0
        %v2421 = vsel %vm331, %v2132, 0
        %v2424 = vsel %vm331, %v2134, 0
        %v2427 = vsel %vm331, %v2136, 0
        %v2430 = vsel %vm331, %v2138, 0
        %v2433 = vsel %vm331, %v2140, 0
        %v2436 = vsel %vm331, %v2142, 0
        %v2439 = vsel %vm331, %v2144, 0
        %v2442 = vsel %vm331, %v2146, 0
        %v2445 = vsel %vm331, %v2148, 0
        %v2448 = vsel %vm331, %v2150, 0
        %v2451 = vsel %vm331, %v2152, 0
        %v2454 = vsel %vm331, %v2154, 0
        %v2457 = vsel %vm331, %v2156, 0
        %v2460 = vsel %vm331, %v2158, 0
        %v2463 = vsel %vm331, %v2160, 0
        %v2466 = vsel %vm331, %v2162, 0
        %v2469 = vsel %vm331, %v2164, 0
        %v2472 = vsel %vm331, %v2166, 0
        %v2475 = vsel %vm331, %v2168, 0
        %v2478 = vsel %vm331, %v2170, 0
        %v2481 = vsel %vm331, %v2172, 0
        %v2484 = vsel %vm331, %v2174, 0
        %v2487 = vsel %vm331, %v2176, 0
        %v2490 = vsel %vm331, %v2178, 0
        %v2493 = vsel %vm331, %v2180, 0
        %v2496 = vsel %vm331, %v2182, 0
        %v2499 = vsel %vm331, %v2184, 0
        %2501 = vmatprep.subr.mxu0 0.0
        %2502 = vmatpush1.msra.mxu0 %v2266
        %2503 = vmatprep.subr.mxu0 0.0
        %2504 = vmatpush1.msra.mxu0 %v2267
        %2505 = vmatprep.subr.mxu0 0.0
        %2506 = vmatpush1.msra.mxu0 %v2268
        %2507 = vmatprep.subr.mxu0 0.0
        %2508 = vmatpush1.msra.mxu0 %v2269
        %2509 = vmatprep.subr.mxu0 0.0
        %2510 = vmatpush1.msra.mxu0 %v2270
        %2511 = vmatprep.subr.mxu0 0.0
        %2512 = vmatpush1.msra.mxu0 %v2271
        %2513 = vmatprep.subr.mxu0 0.0
        %2514 = vmatpush1.msra.mxu0 %v2272
        %2515 = vmatprep.subr.mxu0 0.0
        %2516 = vmatpush1.msra.mxu0 %v2273
        %2517 = vmatprep.subr.mxu0 0.0
        %2518 = vmatpush1.msra.mxu0 %v2274
        %2519 = vmatprep.subr.mxu0 0.0
        %2520 = vmatpush1.msra.mxu0 %v2275
        %2521 = vmatprep.subr.mxu0 0.0
        %2522 = vmatpush1.msra.mxu0 %v2276
        %2523 = vmatprep.subr.mxu0 0.0
        %2524 = vmatpush1.msra.mxu0 %v2277
        %2525 = vmatprep.subr.mxu0 0.0
        %2526 = vmatpush1.msra.mxu0 %v2278
        %2527 = vmatprep.subr.mxu0 0.0
        %2528 = vmatpush1.msra.mxu0 %v2279
        %2529 = vmatprep.subr.mxu0 0.0
        %2530 = vmatpush1.msra.mxu0 %v2280
        %2531 = vmatprep.subr.mxu0 0.0
        %2532 = vmatpush1.msra.mxu0 %v2281
        %2533 = vmatprep.subr.mxu0 0.0
        %2534 = vmatpush1.msra.mxu0 %v2282
        %2535 = vmatprep.subr.mxu0 0.0
        %2536 = vmatpush1.msra.mxu0 %v2283
        %2537 = vmatprep.subr.mxu0 0.0
        %2538 = vmatpush1.msra.mxu0 %v2284
        %2539 = vmatprep.subr.mxu0 0.0
        %2540 = vmatpush1.msra.mxu0 %v2285
        %2541 = vmatprep.subr.mxu0 0.0
        %2542 = vmatpush1.msra.mxu0 0.0
        %2543 = vmatprep.subr.mxu0 0.0
        %2544 = vmatpush1.msra.mxu0 0.0
        %2545 = vmatprep.subr.mxu0 0.0
        %2546 = vmatpush1.msra.mxu0 0.0
        %2547 = vmatprep.subr.mxu0 0.0
        %2548 = vmatpush1.msra.mxu0 0.0
        %2549 = vmatprep.subr.mxu0 0.0
        %2550 = vmatpush1.msra.mxu0 0.0
        %2551 = vmatprep.subr.mxu0 0.0
        %2552 = vmatpush1.msra.mxu0 0.0
        %2553 = vmatprep.subr.mxu0 0.0
        %2554 = vmatpush1.msra.mxu0 0.0
        %2555 = vmatprep.subr.mxu0 0.0
        %2556 = vmatpush1.msra.mxu0 0.0
        %2557 = vmatprep.subr.mxu0 0.0
        %2558 = vmatpush1.msra.mxu0 0.0
        %2559 = vmatprep.subr.mxu0 0.0
        %2560 = vmatpush1.msra.mxu0 0.0
        %2561 = vmatprep.subr.mxu0 0.0
        %2562 = vmatpush1.msra.mxu0 0.0
        %2563 = vmatprep.subr.mxu0 0.0
        %2564 = vmatpush1.msra.mxu0 0.0
        %2565 = vmatprep.mubr.f32.mxu0 %v2307
        %2566 = vmatmul.mubr.f32.gmra.mrb[0].mxu0 %v2055
        %v2567 = vpop.f32.mrb[0].mxu0
        %v2568 = vadd.f32 0.0, %v2567
        %v2569 = vpop.f32.mrb[0].mxu0
        %2570 = vmatprep.mubr.f32.mxu0 %v2310
        %2571 = vmatmul.mubr.f32.gmra.mrb[0].mxu0 %v2057
        %v2572 = vpop.f32.mrb[0].mxu0
        %v2573 = vadd.f32 0.0, %v2572
        %v2574 = vpop.f32.mrb[0].mxu0
        %2575 = vmatprep.mubr.f32.mxu0 %v2313
        %2576 = vmatmul.mubr.f32.gmra.mrb[0].mxu0 %v2059
        %v2577 = vpop.f32.mrb[0].mxu0
        %v2578 = vadd.f32 0.0, %v2577
        %v2579 = vpop.f32.mrb[0].mxu0
        %2580 = vmatprep.mubr.f32.mxu0 %v2316
        %2581 = vmatmul.mubr.f32.gmra.mrb[0].mxu0 %v2061
        %v2582 = vpop.f32.mrb[0].mxu0
        %v2583 = vadd.f32 0.0, %v2582
        %v2584 = vpop.f32.mrb[0].mxu0
        %2585 = vmatprep.mubr.f32.mxu0 %v2319
        %2586 = vmatmul.mubr.f32.gmra.mrb[0].mxu0 %v2063
        %v2587 = vpop.f32.mrb[0].mxu0
        %v2588 = vadd.f32 0.0, %v2587
        %v2589 = vpop.f32.mrb[0].mxu0
        %2590 = vmatprep.mubr.f32.mxu0 %v2322
        %2591 = vmatmul.mubr.f32.gmra.mrb[0].mxu0 %v2065
        %v2592 = vpop.f32.mrb[0].mxu0
        %v2593 = vadd.f32 0.0, %v2592
        %v2594 = vpop.f32.mrb[0].mxu0
        %2595 = vmatprep.mubr.f32.mxu0 %v2325
        %2596 = vmatmul.mubr.f32.gmra.mrb[0].mxu0 %v2067
        %v2597 = vpop.f32.mrb[0].mxu0
        %v2598 = vadd.f32 0.0, %v2597
        %v2599 = vpop.f32.mrb[0].mxu0
        %2600 = vmatprep.mubr.f32.mxu0 %v2328
        %2601 = vmatmul.mubr.f32.gmra.mrb[0].mxu0 %v2069
        %v2602 = vpop.f32.mrb[0].mxu0
        %v2603 = vadd.f32 0.0, %v2602
        %v2604 = vpop.f32.mrb[0].mxu0
        %2605 = vmatprep.mubr.f32.mxu0 %v2331
        %2606 = vmatmul.mubr.f32.gmra.mrb[0].mxu0 %v2071
        %v2607 = vpop.f32.mrb[0].mxu0
        %v2608 = vadd.f32 0.0, %v2607
        %v2609 = vpop.f32.mrb[0].mxu0
        %2610 = vmatprep.mubr.f32.mxu0 %v2334
        %2611 = vmatmul.mubr.f32.gmra.mrb[0].mxu0 %v2073
        %v2612 = vpop.f32.mrb[0].mxu0
        %v2613 = vadd.f32 0.0, %v2612
        %v2614 = vpop.f32.mrb[0].mxu0
        %2615 = vmatprep.mubr.f32.mxu0 %v2337
        %2616 = vmatmul.mubr.f32.gmra.mrb[0].mxu0 %v2075
        %v2617 = vpop.f32.mrb[0].mxu0
        %v2618 = vadd.f32 0.0, %v2617
        %v2619 = vpop.f32.mrb[0].mxu0
        %2620 = vmatprep.mubr.f32.mxu0 %v2340
        %2621 = vmatmul.mubr.f32.gmra.mrb[0].mxu0 %v2077
        %v2622 = vpop.f32.mrb[0].mxu0
        %v2623 = vadd.f32 0.0, %v2622
        %v2624 = vpop.f32.mrb[0].mxu0
        %2625 = vmatprep.mubr.f32.mxu0 %v2343
        %2626 = vmatmul.mubr.f32.gmra.mrb[0].mxu0 %v2079
        %v2627 = vpop.f32.mrb[0].mxu0
        %v2628 = vadd.f32 0.0, %v2627
        %v2629 = vpop.f32.mrb[0].mxu0
        %2630 = vmatprep.mubr.f32.mxu0 %v2346
        %2631 = vmatmul.mubr.f32.gmra.mrb[0].mxu0 %v2081
        %v2632 = vpop.f32.mrb[0].mxu0
        %v2633 = vadd.f32 0.0, %v2632
        %v2634 = vpop.f32.mrb[0].mxu0
        %2635 = vmatprep.mubr.f32.mxu0 %v2349
        %2636 = vmatmul.mubr.f32.gmra.mrb[0].mxu0 %v2083
        %v2637 = vpop.f32.mrb[0].mxu0
        %v2638 = vadd.f32 0.0, %v2637
        %v2639 = vpop.f32.mrb[0].mxu0
        %2640 = vmatprep.mubr.f32.mxu0 %v2352
        %2641 = vmatmul.mubr.f32.gmra.mrb[0].mxu0 %v2085
        %v2642 = vpop.f32.mrb[0].mxu0
        %v2643 = vadd.f32 0.0, %v2642
        %v2644 = vpop.f32.mrb[0].mxu0
        %2645 = vmatprep.mubr.f32.mxu0 %v2355
        %2646 = vmatmul.mubr.f32.gmra.mrb[0].mxu0 %v2087
        %v2647 = vpop.f32.mrb[0].mxu0
        %v2648 = vadd.f32 0.0, %v2647
        %v2649 = vpop.f32.mrb[0].mxu0
        %2650 = vmatprep.mubr.f32.mxu0 %v2358
        %2651 = vmatmul.mubr.f32.gmra.mrb[0].mxu0 %v2089
        %v2652 = vpop.f32.mrb[0].mxu0
        %v2653 = vadd.f32 0.0, %v2652
        %v2654 = vpop.f32.mrb[0].mxu0
        %2655 = vmatprep.mubr.f32.mxu0 %v2361
        %2656 = vmatmul.mubr.f32.gmra.mrb[0].mxu0 %v2091
        %v2657 = vpop.f32.mrb[0].mxu0
        %v2658 = vadd.f32 0.0, %v2657
        %v2659 = vpop.f32.mrb[0].mxu0
        %2660 = vmatprep.mubr.f32.mxu0 %v2364
        %2661 = vmatmul.mubr.f32.gmra.mrb[0].mxu0 %v2093
        %v2662 = vpop.f32.mrb[0].mxu0
        %v2663 = vadd.f32 0.0, %v2662
        %v2664 = vpop.f32.mrb[0].mxu0
        %2665 = vmatprep.mubr.f32.mxu0 %v2367
        %2666 = vmatmul.mubr.f32.gmra.mrb[0].mxu0 %v2095
        %v2667 = vpop.f32.mrb[0].mxu0
        %v2668 = vadd.f32 0.0, %v2667
        %v2669 = vpop.f32.mrb[0].mxu0
        %2670 = vmatprep.mubr.f32.mxu0 %v2370
        %2671 = vmatmul.mubr.f32.gmra.mrb[0].mxu0 %v2097
        %v2672 = vpop.f32.mrb[0].mxu0
        %v2673 = vadd.f32 0.0, %v2672
        %v2674 = vpop.f32.mrb[0].mxu0
        %2675 = vmatprep.mubr.f32.mxu0 %v2373
        %2676 = vmatmul.mubr.f32.gmra.mrb[0].mxu0 %v2099
        %v2677 = vpop.f32.mrb[0].mxu0
        %v2678 = vadd.f32 0.0, %v2677
        %v2679 = vpop.f32.mrb[0].mxu0
        %2680 = vmatprep.mubr.f32.mxu0 %v2376
        %2681 = vmatmul.mubr.f32.gmra.mrb[0].mxu0 %v2101
        %v2682 = vpop.f32.mrb[0].mxu0
        %v2683 = vadd.f32 0.0, %v2682
        %v2684 = vpop.f32.mrb[0].mxu0
        %2685 = vmatprep.mubr.f32.mxu0 %v2379
        %2686 = vmatmul.mubr.f32.gmra.mrb[0].mxu0 %v2103
        %v2687 = vpop.f32.mrb[0].mxu0
        %v2688 = vadd.f32 0.0, %v2687
        %v2689 = vpop.f32.mrb[0].mxu0
        %2690 = vmatprep.mubr.f32.mxu0 %v2382
        %2691 = vmatmul.mubr.f32.gmra.mrb[0].mxu0 %v2105
        %v2692 = vpop.f32.mrb[0].mxu0
        %v2693 = vadd.f32 0.0, %v2692
        %v2694 = vpop.f32.mrb[0].mxu0
        %2695 = vmatprep.mubr.f32.mxu0 %v2385
        %2696 = vmatmul.mubr.f32.gmra.mrb[0].mxu0 %v2107
        %v2697 = vpop.f32.mrb[0].mxu0
        %v2698 = vadd.f32 0.0, %v2697
        %v2699 = vpop.f32.mrb[0].mxu0
        %2700 = vmatprep.mubr.f32.mxu0 %v2388
        %2701 = vmatmul.mubr.f32.gmra.mrb[0].mxu0 %v2109
        %v2702 = vpop.f32.mrb[0].mxu0
        %v2703 = vadd.f32 0.0, %v2702
        %v2704 = vpop.f32.mrb[0].mxu0
        %2705 = vmatprep.mubr.f32.mxu0 %v2391
        %2706 = vmatmul.mubr.f32.gmra.mrb[0].mxu0 %v2111
        %v2707 = vpop.f32.mrb[0].mxu0
        %v2708 = vadd.f32 0.0, %v2707
        %v2709 = vpop.f32.mrb[0].mxu0
        %2710 = vmatprep.mubr.f32.mxu0 %v2394
        %2711 = vmatmul.mubr.f32.gmra.mrb[0].mxu0 %v2113
        %v2712 = vpop.f32.mrb[0].mxu0
        %v2713 = vadd.f32 0.0, %v2712
        %v2714 = vpop.f32.mrb[0].mxu0
        %2715 = vmatprep.mubr.f32.mxu0 %v2397
        %2716 = vmatmul.mubr.f32.gmra.mrb[0].mxu0 %v2115
        %v2717 = vpop.f32.mrb[0].mxu0
        %v2718 = vadd.f32 0.0, %v2717
        %v2719 = vpop.f32.mrb[0].mxu0
        %2720 = vmatprep.mubr.f32.mxu0 %v2400
        %2721 = vmatmul.mubr.f32.gmra.mrb[0].mxu0 %v2117
        %v2722 = vpop.f32.mrb[0].mxu0
        %v2723 = vadd.f32 0.0, %v2722
        %v2724 = vpop.f32.mrb[0].mxu0
        %2725 = vmatprep.mubr.f32.mxu0 %v2403
        %2726 = vmatmul.mubr.f32.gmra.mrb[0].mxu0 %v2119
        %v2727 = vpop.f32.mrb[0].mxu0
        %v2728 = vadd.f32 0.0, %v2727
        %v2729 = vpop.f32.mrb[0].mxu0
        %2730 = vmatprep.mubr.f32.mxu0 %v2406
        %2731 = vmatmul.mubr.f32.gmra.mrb[0].mxu0 %v2121
        %v2732 = vpop.f32.mrb[0].mxu0
        %v2733 = vadd.f32 0.0, %v2732
        %v2734 = vpop.f32.mrb[0].mxu0
        %2735 = vmatprep.mubr.f32.mxu0 %v2409
        %2736 = vmatmul.mubr.f32.gmra.mrb[0].mxu0 %v2123
        %v2737 = vpop.f32.mrb[0].mxu0
        %v2738 = vadd.f32 0.0, %v2737
        %v2739 = vpop.f32.mrb[0].mxu0
        %2740 = vmatprep.mubr.f32.mxu0 %v2412
        %2741 = vmatmul.mubr.f32.gmra.mrb[0].mxu0 %v2125
        %v2742 = vpop.f32.mrb[0].mxu0
        %v2743 = vadd.f32 0.0, %v2742
        %v2744 = vpop.f32.mrb[0].mxu0
        %2745 = vmatprep.mubr.f32.mxu0 %v2415
        %2746 = vmatmul.mubr.f32.gmra.mrb[0].mxu0 %v2127
        %v2747 = vpop.f32.mrb[0].mxu0
        %v2748 = vadd.f32 0.0, %v2747
        %v2749 = vpop.f32.mrb[0].mxu0
        %2750 = vmatprep.mubr.f32.mxu0 %v2418
        %2751 = vmatmul.mubr.f32.gmra.mrb[0].mxu0 %v2129
        %v2752 = vpop.f32.mrb[0].mxu0
        %v2753 = vadd.f32 0.0, %v2752
        %v2754 = vpop.f32.mrb[0].mxu0
        %2755 = vmatprep.mubr.f32.mxu0 %v2421
        %2756 = vmatmul.mubr.f32.gmra.mrb[0].mxu0 %v2131
        %v2757 = vpop.f32.mrb[0].mxu0
        %v2758 = vadd.f32 0.0, %v2757
        %v2759 = vpop.f32.mrb[0].mxu0
        %2760 = vmatprep.mubr.f32.mxu0 %v2424
        %2761 = vmatmul.mubr.f32.gmra.mrb[0].mxu0 %v2133
        %v2762 = vpop.f32.mrb[0].mxu0
        %v2763 = vadd.f32 0.0, %v2762
        %v2764 = vpop.f32.mrb[0].mxu0
        %2765 = vmatprep.mubr.f32.mxu0 %v2427
        %2766 = vmatmul.mubr.f32.gmra.mrb[0].mxu0 %v2135
        %v2767 = vpop.f32.mrb[0].mxu0
        %v2768 = vadd.f32 0.0, %v2767
        %v2769 = vpop.f32.mrb[0].mxu0
        %2770 = vmatprep.mubr.f32.mxu0 %v2430
        %2771 = vmatmul.mubr.f32.gmra.mrb[0].mxu0 %v2137
        %v2772 = vpop.f32.mrb[0].mxu0
        %v2773 = vadd.f32 0.0, %v2772
        %v2774 = vpop.f32.mrb[0].mxu0
        %2775 = vmatprep.mubr.f32.mxu0 %v2433
        %2776 = vmatmul.mubr.f32.gmra.mrb[0].mxu0 %v2139
        %v2777 = vpop.f32.mrb[0].mxu0
        %v2778 = vadd.f32 0.0, %v2777
        %v2779 = vpop.f32.mrb[0].mxu0
        %2780 = vmatprep.mubr.f32.mxu0 %v2436
        %2781 = vmatmul.mubr.f32.gmra.mrb[0].mxu0 %v2141
        %v2782 = vpop.f32.mrb[0].mxu0
        %v2783 = vadd.f32 0.0, %v2782
        %v2784 = vpop.f32.mrb[0].mxu0
        %2785 = vmatprep.mubr.f32.mxu0 %v2439
        %2786 = vmatmul.mubr.f32.gmra.mrb[0].mxu0 %v2143
        %v2787 = vpop.f32.mrb[0].mxu0
        %v2788 = vadd.f32 0.0, %v2787
        %v2789 = vpop.f32.mrb[0].mxu0
        %2790 = vmatprep.mubr.f32.mxu0 %v2442
        %2791 = vmatmul.mubr.f32.gmra.mrb[0].mxu0 %v2145
        %v2792 = vpop.f32.mrb[0].mxu0
        %v2793 = vadd.f32 0.0, %v2792
        %v2794 = vpop.f32.mrb[0].mxu0
        %2795 = vmatprep.mubr.f32.mxu0 %v2445
        %2796 = vmatmul.mubr.f32.gmra.mrb[0].mxu0 %v2147
        %v2797 = vpop.f32.mrb[0].mxu0
        %v2798 = vadd.f32 0.0, %v2797
        %v2799 = vpop.f32.mrb[0].mxu0
        %2800 = vmatprep.mubr.f32.mxu0 %v2448
        %2801 = vmatmul.mubr.f32.gmra.mrb[0].mxu0 %v2149
        %v2802 = vpop.f32.mrb[0].mxu0
        %v2803 = vadd.f32 0.0, %v2802
        %v2804 = vpop.f32.mrb[0].mxu0
        %2805 = vmatprep.mubr.f32.mxu0 %v2451
        %2806 = vmatmul.mubr.f32.gmra.mrb[0].mxu0 %v2151
        %v2807 = vpop.f32.mrb[0].mxu0
        %v2808 = vadd.f32 0.0, %v2807
        %v2809 = vpop.f32.mrb[0].mxu0
        %2810 = vmatprep.mubr.f32.mxu0 %v2454
        %2811 = vmatmul.mubr.f32.gmra.mrb[0].mxu0 %v2153
        %v2812 = vpop.f32.mrb[0].mxu0
        %v2813 = vadd.f32 0.0, %v2812
        %v2814 = vpop.f32.mrb[0].mxu0
        %2815 = vmatprep.mubr.f32.mxu0 %v2457
        %2816 = vmatmul.mubr.f32.gmra.mrb[0].mxu0 %v2155
        %v2817 = vpop.f32.mrb[0].mxu0
        %v2818 = vadd.f32 0.0, %v2817
        %v2819 = vpop.f32.mrb[0].mxu0
        %2820 = vmatprep.mubr.f32.mxu0 %v2460
        %2821 = vmatmul.mubr.f32.gmra.mrb[0].mxu0 %v2157
        %v2822 = vpop.f32.mrb[0].mxu0
        %v2823 = vadd.f32 0.0, %v2822
        %v2824 = vpop.f32.mrb[0].mxu0
        %2825 = vmatprep.mubr.f32.mxu0 %v2463
        %2826 = vmatmul.mubr.f32.gmra.mrb[0].mxu0 %v2159
        %v2827 = vpop.f32.mrb[0].mxu0
        %v2828 = vadd.f32 0.0, %v2827
        %v2829 = vpop.f32.mrb[0].mxu0
        %2830 = vmatprep.mubr.f32.mxu0 %v2466
        %2831 = vmatmul.mubr.f32.gmra.mrb[0].mxu0 %v2161
        %v2832 = vpop.f32.mrb[0].mxu0
        %v2833 = vadd.f32 0.0, %v2832
        %v2834 = vpop.f32.mrb[0].mxu0
        %2835 = vmatprep.mubr.f32.mxu0 %v2469
        %2836 = vmatmul.mubr.f32.gmra.mrb[0].mxu0 %v2163
        %v2837 = vpop.f32.mrb[0].mxu0
        %v2838 = vadd.f32 0.0, %v2837
        %v2839 = vpop.f32.mrb[0].mxu0
        %2840 = vmatprep.mubr.f32.mxu0 %v2472
        %2841 = vmatmul.mubr.f32.gmra.mrb[0].mxu0 %v2165
        %v2842 = vpop.f32.mrb[0].mxu0
        %v2843 = vadd.f32 0.0, %v2842
        %v2844 = vpop.f32.mrb[0].mxu0
        %2845 = vmatprep.mubr.f32.mxu0 %v2475
        %2846 = vmatmul.mubr.f32.gmra.mrb[0].mxu0 %v2167
        %v2847 = vpop.f32.mrb[0].mxu0
        %v2848 = vadd.f32 0.0, %v2847
        %v2849 = vpop.f32.mrb[0].mxu0
        %2850 = vmatprep.mubr.f32.mxu0 %v2478
        %2851 = vmatmul.mubr.f32.gmra.mrb[0].mxu0 %v2169
        %v2852 = vpop.f32.mrb[0].mxu0
        %v2853 = vadd.f32 0.0, %v2852
        %v2854 = vpop.f32.mrb[0].mxu0
        %2855 = vmatprep.mubr.f32.mxu0 %v2481
        %2856 = vmatmul.mubr.f32.gmra.mrb[0].mxu0 %v2171
        %v2857 = vpop.f32.mrb[0].mxu0
        %v2858 = vadd.f32 0.0, %v2857
        %v2859 = vpop.f32.mrb[0].mxu0
        %2860 = vmatprep.mubr.f32.mxu0 %v2484
        %2861 = vmatmul.mubr.f32.gmra.mrb[0].mxu0 %v2173
        %v2862 = vpop.f32.mrb[0].mxu0
        %v2863 = vadd.f32 0.0, %v2862
        %v2864 = vpop.f32.mrb[0].mxu0
        %2865 = vmatprep.mubr.f32.mxu0 %v2487
        %2866 = vmatmul.mubr.f32.gmra.mrb[0].mxu0 %v2175
        %v2867 = vpop.f32.mrb[0].mxu0
        %v2868 = vadd.f32 0.0, %v2867
        %v2869 = vpop.f32.mrb[0].mxu0
        %2870 = vmatprep.mubr.f32.mxu0 %v2490
        %2871 = vmatmul.mubr.f32.gmra.mrb[0].mxu0 %v2177
        %v2872 = vpop.f32.mrb[0].mxu0
        %v2873 = vadd.f32 0.0, %v2872
        %v2874 = vpop.f32.mrb[0].mxu0
        %2875 = vmatprep.mubr.f32.mxu0 %v2493
        %2876 = vmatmul.mubr.f32.gmra.mrb[0].mxu0 %v2179
        %v2877 = vpop.f32.mrb[0].mxu0
        %v2878 = vadd.f32 0.0, %v2877
        %v2879 = vpop.f32.mrb[0].mxu0
        %2880 = vmatprep.mubr.f32.mxu0 %v2496
        %2881 = vmatmul.mubr.f32.gmra.mrb[0].mxu0 %v2181
        %v2882 = vpop.f32.mrb[0].mxu0
        %v2883 = vadd.f32 0.0, %v2882
        %v2884 = vpop.f32.mrb[0].mxu0
        %2885 = vmatprep.mubr.f32.mxu0 %v2499
        %2886 = vmatmul.mubr.f32.gmra.mrb[0].mxu0 %v2183
        %v2887 = vpop.f32.mrb[0].mxu0
        %v2888 = vadd.f32 0.0, %v2887
        %v2889 = vpop.f32.mrb[0].mxu0
        %2890 = vdwg.mxu0
        %v2891 = vld [vmem:[%s150] sm:$0xff]
        %v2892 = vld [vmem:[%s150 + $0x8] sm:$0xff]
        %v2893 = vld [vmem:[%s150 + $0x10] sm:$0xff]
        %v2894 = vld [vmem:[%s150 + $0x18] sm:$0xff]
        %v2895 = vld [vmem:[%s150 + $0x20] sm:$0xff]
        %v2896 = vld [vmem:[%s150 + $0x28] sm:$0xff]
        %v2897 = vld [vmem:[%s150 + $0x30] sm:$0xff]
        %v2898 = vld [vmem:[%s150 + $0x38] sm:$0xff]
        %v2899 = vld [vmem:[%s150 + $0x40] sm:$0xff]
        %v2900 = vld [vmem:[%s150 + $0x48] sm:$0xff]
        %v2901 = vld [vmem:[%s150 + $0x50] sm:$0xff]
        %v2902 = vld [vmem:[%s150 + $0x58] sm:$0xff]
        %v2903 = vld [vmem:[%s150 + $0x60] sm:$0xff]
        %v2904 = vld [vmem:[%s150 + $0x68] sm:$0xff]
        %v2905 = vld [vmem:[%s150 + $0x70] sm:$0xff]
        %v2906 = vld [vmem:[%s150 + $0x78] sm:$0xff]
        %v2907 = vld [vmem:[%s150 + $0x80] sm:$0xff]
        %v2908 = vld [vmem:[%s150 + $0x88] sm:$0xff]
        %v2909 = vld [vmem:[%s150 + $0x90] sm:$0xff]
        %v2910 = vld [vmem:[%s150 + $0x98] sm:$0xff]
        %v2911 = vld [vmem:[%s150 + $0xa0] sm:$0xff]
        %v2912 = vld [vmem:[%s150 + $0xa8] sm:$0xff]
        %v2913 = vld [vmem:[%s150 + $0xb0] sm:$0xff]
        %v2914 = vld [vmem:[%s150 + $0xb8] sm:$0xff]
        %v2915 = vld [vmem:[%s150 + $0xc0] sm:$0xff]
        %v2916 = vld [vmem:[%s150 + $0xc8] sm:$0xff]
        %v2917 = vld [vmem:[%s150 + $0xd0] sm:$0xff]
        %v2918 = vld [vmem:[%s150 + $0xd8] sm:$0xff]
        %v2919 = vld [vmem:[%s150 + $0xe0] sm:$0xff]
        %v2920 = vld [vmem:[%s150 + $0xe8] sm:$0xff]
        %v2921 = vld [vmem:[%s150 + $0xf0] sm:$0xff]
        %v2922 = vld [vmem:[%s150 + $0xf8] sm:$0xff]
        %v2923 = vld [vmem:[%s150 + $0x100] sm:$0xff]
        %v2924 = vld [vmem:[%s150 + $0x108] sm:$0xff]
        %v2925 = vld [vmem:[%s150 + $0x110] sm:$0xff]
        %v2926 = vld [vmem:[%s150 + $0x118] sm:$0xff]
        %v2927 = vld [vmem:[%s150 + $0x120] sm:$0xff]
        %v2928 = vld [vmem:[%s150 + $0x128] sm:$0xff]
        %v2929 = vld [vmem:[%s150 + $0x130] sm:$0xff]
        %v2930 = vld [vmem:[%s150 + $0x138] sm:$0xff]
        %v2931 = vld [vmem:[%s150 + $0x140] sm:$0xff]
        %v2932 = vld [vmem:[%s150 + $0x148] sm:$0xff]
        %v2933 = vld [vmem:[%s150 + $0x150] sm:$0xff]
        %v2934 = vld [vmem:[%s150 + $0x158] sm:$0xff]
        %v2935 = vld [vmem:[%s150 + $0x160] sm:$0xff]
        %v2936 = vld [vmem:[%s150 + $0x168] sm:$0xff]
        %v2937 = vld [vmem:[%s150 + $0x170] sm:$0xff]
        %v2938 = vld [vmem:[%s150 + $0x178] sm:$0xff]
        %v2939 = vld [vmem:[%s150 + $0x180] sm:$0xff]
        %v2940 = vld [vmem:[%s150 + $0x188] sm:$0xff]
        %v2941 = vld [vmem:[%s150 + $0x190] sm:$0xff]
        %v2942 = vld [vmem:[%s150 + $0x198] sm:$0xff]
        %v2943 = vld [vmem:[%s150 + $0x1a0] sm:$0xff]
        %v2944 = vld [vmem:[%s150 + $0x1a8] sm:$0xff]
        %v2945 = vld [vmem:[%s150 + $0x1b0] sm:$0xff]
        %v2946 = vld [vmem:[%s150 + $0x1b8] sm:$0xff]
        %v2947 = vld [vmem:[%s150 + $0x1c0] sm:$0xff]
        %v2948 = vld [vmem:[%s150 + $0x1c8] sm:$0xff]
        %v2949 = vld [vmem:[%s150 + $0x1d0] sm:$0xff]
        %v2950 = vld [vmem:[%s150 + $0x1d8] sm:$0xff]
        %v2951 = vld [vmem:[%s150 + $0x1e0] sm:$0xff]
        %v2952 = vld [vmem:[%s150 + $0x1e8] sm:$0xff]
        %v2953 = vld [vmem:[%s150 + $0x1f0] sm:$0xff]
        %v2954 = vld [vmem:[%s150 + $0x1f8] sm:$0xff]
        %v2955 = vld [vmem:[%s150 + $0x200] sm:$0xff]
        %v2956 = vadd.f32 %v2891, %v2568
        %v2957 = vadd.f32 %v2892, %v2573
        %v2958 = vadd.f32 %v2893, %v2578
        %v2959 = vadd.f32 %v2894, %v2583
        %v2960 = vadd.f32 %v2895, %v2588
        %v2961 = vadd.f32 %v2896, %v2593
        %v2962 = vadd.f32 %v2897, %v2598
        %v2963 = vadd.f32 %v2898, %v2603
        %v2964 = vadd.f32 %v2899, %v2608
        %v2965 = vadd.f32 %v2900, %v2613
        %v2966 = vadd.f32 %v2901, %v2618
        %v2967 = vadd.f32 %v2902, %v2623
        %v2968 = vadd.f32 %v2903, %v2628
        %v2969 = vadd.f32 %v2904, %v2633
        %v2970 = vadd.f32 %v2905, %v2638
        %v2971 = vadd.f32 %v2906, %v2643
        %v2972 = vadd.f32 %v2907, %v2648
        %v2973 = vadd.f32 %v2908, %v2653
        %v2974 = vadd.f32 %v2909, %v2658
        %v2975 = vadd.f32 %v2910, %v2663
        %v2976 = vadd.f32 %v2911, %v2668
        %v2977 = vadd.f32 %v2912, %v2673
        %v2978 = vadd.f32 %v2913, %v2678
        %v2979 = vadd.f32 %v2914, %v2683
        %v2980 = vadd.f32 %v2915, %v2688
        %v2981 = vadd.f32 %v2916, %v2693
        %v2982 = vadd.f32 %v2917, %v2698
        %v2983 = vadd.f32 %v2918, %v2703
        %v2984 = vadd.f32 %v2919, %v2708
        %v2985 = vadd.f32 %v2920, %v2713
        %v2986 = vadd.f32 %v2921, %v2718
        %v2987 = vadd.f32 %v2922, %v2723
        %v2988 = vadd.f32 %v2923, %v2728
        %v2989 = vadd.f32 %v2924, %v2733
        %v2990 = vadd.f32 %v2925, %v2738
        %v2991 = vadd.f32 %v2926, %v2743
        %v2992 = vadd.f32 %v2927, %v2748
        %v2993 = vadd.f32 %v2928, %v2753
        %v2994 = vadd.f32 %v2929, %v2758
        %v2995 = vadd.f32 %v2930, %v2763
        %v2996 = vadd.f32 %v2931, %v2768
        %v2997 = vadd.f32 %v2932, %v2773
        %v2998 = vadd.f32 %v2933, %v2778
        %v2999 = vadd.f32 %v2934, %v2783
        %v3000 = vadd.f32 %v2935, %v2788
        %v3001 = vadd.f32 %v2936, %v2793
        %v3002 = vadd.f32 %v2937, %v2798
        %v3003 = vadd.f32 %v2938, %v2803
        %v3004 = vadd.f32 %v2939, %v2808
        %v3005 = vadd.f32 %v2940, %v2813
        %v3006 = vadd.f32 %v2941, %v2818
        %v3007 = vadd.f32 %v2942, %v2823
        %v3008 = vadd.f32 %v2943, %v2828
        %v3009 = vadd.f32 %v2944, %v2833
        %v3010 = vadd.f32 %v2945, %v2838
        %v3011 = vadd.f32 %v2946, %v2843
        %v3012 = vadd.f32 %v2947, %v2848
        %v3013 = vadd.f32 %v2948, %v2853
        %v3014 = vadd.f32 %v2949, %v2858
        %v3015 = vadd.f32 %v2950, %v2863
        %v3016 = vadd.f32 %v2951, %v2868
        %v3017 = vadd.f32 %v2952, %v2873
        %v3018 = vadd.f32 %v2953, %v2878
        %v3019 = vadd.f32 %v2954, %v2883
        %v3020 = vadd.f32 %v2955, %v2888
        %3021 = vst [vmem:[%s150] sm:$0xff] %v2956
        %3022 = vst [vmem:[%s150 + $0x8] sm:$0xff] %v2957
        %3023 = vst [vmem:[%s150 + $0x10] sm:$0xff] %v2958
        %3024 = vst [vmem:[%s150 + $0x18] sm:$0xff] %v2959
        %3025 = vst [vmem:[%s150 + $0x20] sm:$0xff] %v2960
        %3026 = vst [vmem:[%s150 + $0x28] sm:$0xff] %v2961
        %3027 = vst [vmem:[%s150 + $0x30] sm:$0xff] %v2962
        %3028 = vst [vmem:[%s150 + $0x38] sm:$0xff] %v2963
        %3029 = vst [vmem:[%s150 + $0x40] sm:$0xff] %v2964
        %3030 = vst [vmem:[%s150 + $0x48] sm:$0xff] %v2965
        %3031 = vst [vmem:[%s150 + $0x50] sm:$0xff] %v2966
        %3032 = vst [vmem:[%s150 + $0x58] sm:$0xff] %v2967
        %3033 = vst [vmem:[%s150 + $0x60] sm:$0xff] %v2968
        %3034 = vst [vmem:[%s150 + $0x68] sm:$0xff] %v2969
        %3035 = vst [vmem:[%s150 + $0x70] sm:$0xff] %v2970
        %3036 = vst [vmem:[%s150 + $0x78] sm:$0xff] %v2971
        %3037 = vst [vmem:[%s150 + $0x80] sm:$0xff] %v2972
        %3038 = vst [vmem:[%s150 + $0x88] sm:$0xff] %v2973
        %3039 = vst [vmem:[%s150 + $0x90] sm:$0xff] %v2974
        %3040 = vst [vmem:[%s150 + $0x98] sm:$0xff] %v2975
        %3041 = vst [vmem:[%s150 + $0xa0] sm:$0xff] %v2976
        %3042 = vst [vmem:[%s150 + $0xa8] sm:$0xff] %v2977
        %3043 = vst [vmem:[%s150 + $0xb0] sm:$0xff] %v2978
        %3044 = vst [vmem:[%s150 + $0xb8] sm:$0xff] %v2979
        %3045 = vst [vmem:[%s150 + $0xc0] sm:$0xff] %v2980
        %3046 = vst [vmem:[%s150 + $0xc8] sm:$0xff] %v2981
        %3047 = vst [vmem:[%s150 + $0xd0] sm:$0xff] %v2982
        %3048 = vst [vmem:[%s150 + $0xd8] sm:$0xff] %v2983
        %3049 = vst [vmem:[%s150 + $0xe0] sm:$0xff] %v2984
        %3050 = vst [vmem:[%s150 + $0xe8] sm:$0xff] %v2985
        %3051 = vst [vmem:[%s150 + $0xf0] sm:$0xff] %v2986
        %3052 = vst [vmem:[%s150 + $0xf8] sm:$0xff] %v2987
        %3053 = vst [vmem:[%s150 + $0x100] sm:$0xff] %v2988
        %3054 = vst [vmem:[%s150 + $0x108] sm:$0xff] %v2989
        %3055 = vst [vmem:[%s150 + $0x110] sm:$0xff] %v2990
        %3056 = vst [vmem:[%s150 + $0x118] sm:$0xff] %v2991
        %3057 = vst [vmem:[%s150 + $0x120] sm:$0xff] %v2992
        %3058 = vst [vmem:[%s150 + $0x128] sm:$0xff] %v2993
        %3059 = vst [vmem:[%s150 + $0x130] sm:$0xff] %v2994
        %3060 = vst [vmem:[%s150 + $0x138] sm:$0xff] %v2995
        %3061 = vst [vmem:[%s150 + $0x140] sm:$0xff] %v2996
        %3062 = vst [vmem:[%s150 + $0x148] sm:$0xff] %v2997
        %3063 = vst [vmem:[%s150 + $0x150] sm:$0xff] %v2998
        %3064 = vst [vmem:[%s150 + $0x158] sm:$0xff] %v2999
        %3065 = vst [vmem:[%s150 + $0x160] sm:$0xff] %v3000
        %3066 = vst [vmem:[%s150 + $0x168] sm:$0xff] %v3001
        %3067 = vst [vmem:[%s150 + $0x170] sm:$0xff] %v3002
        %3068 = vst [vmem:[%s150 + $0x178] sm:$0xff] %v3003
        %3069 = vst [vmem:[%s150 + $0x180] sm:$0xff] %v3004
        %3070 = vst [vmem:[%s150 + $0x188] sm:$0xff] %v3005
        %3071 = vst [vmem:[%s150 + $0x190] sm:$0xff] %v3006
        %3072 = vst [vmem:[%s150 + $0x198] sm:$0xff] %v3007
        %3073 = vst [vmem:[%s150 + $0x1a0] sm:$0xff] %v3008
        %3074 = vst [vmem:[%s150 + $0x1a8] sm:$0xff] %v3009
        %3075 = vst [vmem:[%s150 + $0x1b0] sm:$0xff] %v3010
        %3076 = vst [vmem:[%s150 + $0x1b8] sm:$0xff] %v3011
        %3077 = vst [vmem:[%s150 + $0x1c0] sm:$0xff] %v3012
        %3078 = vst [vmem:[%s150 + $0x1c8] sm:$0xff] %v3013
        %3079 = vst [vmem:[%s150 + $0x1d0] sm:$0xff] %v3014
        %3080 = vst [vmem:[%s150 + $0x1d8] sm:$0xff] %v3015
        %3081 = vst [vmem:[%s150 + $0x1e0] sm:$0xff] %v3016
        %3082 = vst [vmem:[%s150 + $0x1e8] sm:$0xff] %v3017
        %3083 = vst [vmem:[%s150 + $0x1f0] sm:$0xff] %v3018
        %3084 = vst [vmem:[%s150 + $0x1f8] sm:$0xff] %v3019
        %3085 = vst [vmem:[%s150 + $0x200] sm:$0xff] %v3020
        %s3086 = sand.u32 %s85, 1
        %s3087 = scalar_lea.sflag [#allocation3], %s3086
        %s3088 = sand.u32 %s85, 1
        %s3089 = smul.addr %s3088, 520
        %s3090 = scalar_lea.vmem [#allocation2], %s3089
        // Predicated region
        $region29: #{tpu_custom_call.1} parent=27 // pred_check
          %p3091 = pneg %p95
        $region30: #{tpu_custom_call.1} parent=27 // pred_check_branch
          %3093 = sbr.rel (%p3091) target = $region32
        $region31: #{tpu_custom_call.1} parent=27 // pred_region
          %s3095 = ssub.s32 8320, 8320
          %3096 = vsyncadd %s3087, %s3095
          %s3097 = smul.addr %s20, 130
          %s3098 = sadd.s32 %s21, %s3097
          %s3099 = smul.addr %s3098, 128
          %s3100 = scalar_lea.hbm %s2, %s3099
          %s3101 = sshll.u32 %s3090, 4
          %s3102 = int_to_ptr.vmem [resolvable:$true] %s3101
          %3107 = dma.vmem_to_hbm [thread:$0]  %s3102, 8320, %s3100, %s3087, 128, 256, 8
        $region32: #{tpu_custom_call.1} parent=27 // pred_fallthru
          _
      $region28: #{tpu_custom_call.1} parent=5 // pred_fallthru
        _
      %p3108 = scmp.le.s32.totalorder 2, %s11
      // Predicated region
      $region33: #{tpu_custom_call.1} parent=5 // pred_check
        %p3109 = pneg %p3108
      $region34: #{tpu_custom_call.1} parent=5 // pred_check_branch
        %3111 = sbr.rel (%p3109) target = $region36
      $region35: #{tpu_custom_call.1} parent=5 // pred_region
        %s3112 = ssub.s32 %s11, 2
        // Predicated region
        $region37: #{tpu_custom_call.1} parent=35 // pred_check
          %p3113 = pneg %p101
        $region38: #{tpu_custom_call.1} parent=35 // pred_check_branch
          %3115 = sbr.rel (%p3113) target = $region40
        $region39: #{tpu_custom_call.1} parent=35 // pred_region
          %s3116 = sand.u32 %s86, 1
          %s3117 = scalar_lea.sflag [#allocation3], %s3116
          %s3118 = sand.u32 %s86, 1
          %s3119 = smul.addr %s3118, 520
          %s3120 = scalar_lea.vmem [#allocation2], %s3119
          %3121 = dma.done %s3117, 8320
        $region40: #{tpu_custom_call.1} parent=35 // pred_fallthru
          _
      $region36: #{tpu_custom_call.1} parent=5 // pred_fallthru
        _
    $region6: #{tpu_custom_call.1} parent=1 // loop_footer
      %s15 = sadd.s32 1, %s11
    $region7: #{tpu_custom_call.1} parent=1 // loop_footer_branch
      %10 = sbr.rel target = $region3
    $region8: #{tpu_custom_call.1} parent=1 // loop_exit
      _
    %3122 = vsyncpa [#allocation3], 1
    %s3123 = scalar_lea.sflag [#allocation3], 1
    %3124 = vsyncpa %s3123, 1

</llo_original>
